<compile_context>
chip_gen: v7x
topology: tpu7x:2x2x1
jax: 0.10.0
libtpu: 0.0.40
codegen_flags: <defaults>
</compile_context>

<pallas_src>
import functools

import jax
import jax.numpy as jnp
from jax.experimental import pallas as pl
from jax.experimental.pallas import tpu as pltpu


# ----------------------------------------------------------------------------- helpers
def _hw_info():
    """(physical VMEM bytes per core, #TensorCores per chip) with safe fallbacks."""
    vmem = 128 << 20
    kind = ""
    try:
        kind = (jax.devices()[0].device_kind or "")
    except Exception:
        pass
    try:
        vmem = int(pltpu.get_tpu_info().vmem_capacity_bytes)
    except Exception:
        pass
    is_v7x = ("v7" in kind.lower()) or ("7x" in kind.lower()) or vmem <= (64 << 20)
    if is_v7x:
        vmem = min(vmem, 64 << 20)
    return vmem, (2 if is_v7x else 1)


def _plan(B, C, HW, x_itemsize, weight_bytes):
    """Pick execution mode, batches-per-block, HW tile and the scoped-VMEM limit."""
    vmem_cap, num_tc = _hw_info()
    vmem_limit = max(32 << 20, min((vmem_cap * 7) // 8, vmem_cap - (8 << 20)))
    slack = 4 << 20                              # compiler scratch + small f32 intermediates
    # x and out blocks are each double-buffered by the pipeline; weights are resident
    # (double-buffered once) and must be budgeted too.
    block_budget = max(0, (vmem_limit - 2 * weight_bytes - slack) // 4)
    per_batch = C * HW * x_itemsize

    if per_batch and per_batch <= block_budget:
        tb = max(1, min(B, block_budget // per_batch))
        while B % tb:                            # keep the grid exact
            tb -= 1
        if num_tc >= 2:
            # v7x only: prefer a grid length that is a multiple of the core count so
            # both TensorCores share the HBM traffic, as long as each block stays big
            # enough (>= 1 MiB) to amortize the ~0.35 us per-step overhead.
            for cand in range(tb, 0, -1):
                if B % cand == 0 and (B // cand) % num_tc == 0 and cand * per_batch >= (1 << 20):
                    tb = cand
                    break
        return "single", tb, None, vmem_limit

    # Fallback: one batch per step, HW split into lane-aligned tiles.
    hw_t = max(128, (block_budget // max(1, C * x_itemsize)) // 128 * 128)
    return "tiled", 1, hw_t, vmem_limit


def _fc_gate(y, w1_ref, b1_ref, w2_ref, b2_ref, use_mxu):
    """Pooled descriptor y (N, C) f32 -> sigmoid gate (N, C) f32."""
    w1 = w1_ref[...].astype(jnp.float32)
    if use_mxu:
        h = jnp.dot(y, w1, preferred_element_type=jnp.float32)            # w1: (C, HID)
    else:
        h = jnp.sum(y[:, None, :] * w1[None, :, :], axis=-1)              # w1: (HID, C)
    h = jnp.maximum(h + b1_ref[...].astype(jnp.float32), 0.0)             # (N, HID)

    w2t = w2_ref[...].astype(jnp.float32)                                 # (HID, C)
    if use_mxu:
        s = jnp.dot(h, w2t, preferred_element_type=jnp.float32)
    else:
        # Lane-dense fc2: unrolled accumulation over HID keeps C on the lane axis.
        s = jnp.zeros((y.shape[0], w2t.shape[1]), jnp.float32)
        for k in range(w2t.shape[0]):
            s = s + h[:, k:k + 1] * w2t[k:k + 1, :]
    return jax.nn.sigmoid(s + b2_ref[...].astype(jnp.float32))            # (N, C)


# ----------------------------------------------------------------------------- kernels
def _se_kernel(x_ref, w1_ref, b1_ref, w2_ref, b2_ref, o_ref, *, hw, use_mxu):
    """Single-pass SE: pool + FCs + scale on a (TB, C, HW) block."""
    y = jnp.sum(x_ref[...], axis=-1, dtype=jnp.float32) * (1.0 / hw)      # (TB, C)
    s = _fc_gate(y, w1_ref, b1_ref, w2_ref, b2_ref, use_mxu)              # (TB, C)
    # TODO(synk): for bf16 inputs the gate is pre-cast to the storage dtype before the
    # multiply (slightly lower precision than an all-f32 reference); fine for SE gating.
    o_ref[...] = x_ref[...] * s.astype(o_ref.dtype)[:, :, None]


def _pool_gate_kernel(x_ref, w1_ref, b1_ref, w2_ref, b2_ref, s_ref, acc_ref, *,
                      hw, hw_t, use_mxu):
    """Tiled pass 1: pooled sum over HW tiles, gate computed on the last tile."""
    t = pl.program_id(1)

    @pl.when(t == 0)
    def _():
        acc_ref[...] = jnp.zeros_like(acc_ref)

    xv = x_ref[...]                                                       # (1, C, hw_t)
    if hw % hw_t:                                # mask the overrun lanes of the last tile
        lane = jax.lax.broadcasted_iota(jnp.int32, xv.shape, 2)
        xv = jnp.where(t * hw_t + lane < hw, xv, jnp.zeros_like(xv))
    acc_ref[...] += jnp.sum(xv, axis=-1, dtype=jnp.float32)               # (1, C)

    @pl.when(t == pl.num_programs(1) - 1)
    def _():
        y = acc_ref[...] * (1.0 / hw)                                     # (1, C)
        s = _fc_gate(y, w1_ref, b1_ref, w2_ref, b2_ref, use_mxu)          # (1, C)
        s_ref[...] = s[:, :, None]                                        # (1, C, 1)


def _scale_kernel(x_ref, s_ref, o_ref):
    """Tiled pass 2: out = x * gate (gate block is (1, C, 1), broadcast over lanes)."""
    o_ref[...] = x_ref[...] * s_ref[...].astype(o_ref.dtype)


# ----------------------------------------------------------------------------- wrapper
def knowledge_attention(x, w1, b1, w2, b2, *, force_tiled=False, force_mxu=False,
                        hw_tile=None, donate_x=False):
    """x: (B, C, H, W).  w1: (C//16, C)  b1: (C//16,)  w2: (C, C//16)  b2: (C,).

    Intended to be called under the caller's jax.jit; also works eagerly (as here).
    """
    B, C, H, W = x.shape
    HID = w1.shape[0]
    HW = H * W
    itemsize = jnp.dtype(x.dtype).itemsize
    w_itemsize = jnp.dtype(w1.dtype).itemsize
    weight_bytes = (w1.size + b1.size + w2.size + b2.size) * w_itemsize

    mode, TB, hw_t_auto, vmem_limit = _plan(B, C, HW, itemsize, weight_bytes)
    if force_tiled:
        mode = "tiled"
    use_mxu = bool(force_mxu or C >= 512)

    x_flat = x.reshape(B, C, HW)
    w1_in = w1.T if use_mxu else w1              # MXU path wants (C, HID); VPU keeps (HID, C)
    w2_in = w2.T                                 # (HID, C): gate stays lane-dense
    b1_row = b1.reshape(1, HID)
    b2_row = b2.reshape(1, C)
    aliases = {0: 0} if donate_x else {}         # save an HBM output alloc when x is donated

    compiler = lambda sem: pltpu.CompilerParams(
        dimension_semantics=sem, vmem_limit_bytes=int(vmem_limit))

    if mode == "single":
        cost = pl.CostEstimate(
            flops=2 * B * C * HW + 4 * B * C * HID,
            transcendentals=B * C,
            bytes_accessed=2 * B * C * HW * itemsize + weight_bytes,
        )
        out_flat = pl.pallas_call(
            functools.partial(_se_kernel, hw=HW, use_mxu=use_mxu),
            out_shape=jax.ShapeDtypeStruct((B, C, HW), x.dtype),
            grid_spec=pltpu.PrefetchScalarGridSpec(
                num_scalar_prefetch=0,
                grid=(B // TB,),
                in_specs=[
                    pl.BlockSpec((TB, C, HW), lambda b: (b, 0, 0)),   # full-HW last dim
                    pl.BlockSpec(w1_in.shape, lambda b: (0, 0)),      # resident weights
                    pl.BlockSpec((1, HID), lambda b: (0, 0)),
                    pl.BlockSpec((HID, C), lambda b: (0, 0)),
                    pl.BlockSpec((1, C), lambda b: (0, 0)),
                ],
                out_specs=pl.BlockSpec((TB, C, HW), lambda b: (b, 0, 0)),
            ),
            compiler_params=compiler(("parallel",)),
            cost_estimate=cost,
            input_output_aliases=aliases,
        )(x_flat, w1_in, b1_row, w2_in, b2_row)
        return out_flat.reshape(B, C, H, W)

    # ---- HW-tiled two-pass fallback (large C*HW slabs, or forced for testing) ----
    hw_t = int(hw_tile) if hw_tile is not None else (hw_t_auto if hw_t_auto else HW)
    if hw_t >= HW:
        hw_t = HW                                # single full-extent tile (still valid)
    else:
        hw_t = max(128, (hw_t // 128) * 128)     # lane-aligned tiles when splitting HW
    n_hw = -(-HW // hw_t)

    cost_pool = pl.CostEstimate(
        flops=B * C * HW + 4 * B * C * HID,
        transcendentals=B * C,
        bytes_accessed=B * C * HW * itemsize + B * C * 4 + weight_bytes,
    )
    gate = pl.pallas_call(
        functools.partial(_pool_gate_kernel, hw=HW, hw_t=hw_t, use_mxu=use_mxu),
        out_shape=jax.ShapeDtypeStruct((B, C, 1), jnp.float32),
        grid_spec=pltpu.PrefetchScalarGridSpec(
            num_scalar_prefetch=0,
            grid=(B, n_hw),
            in_specs=[
                pl.BlockSpec((1, C, hw_t), lambda b, t: (b, 0, t)),
                pl.BlockSpec(w1_in.shape, lambda b, t: (0, 0)),
                pl.BlockSpec((1, HID), lambda b, t: (0, 0)),
                pl.BlockSpec((HID, C), lambda b, t: (0, 0)),
                pl.BlockSpec((1, C), lambda b, t: (0, 0)),
            ],
            out_specs=pl.BlockSpec((1, C, 1), lambda b, t: (b, 0, 0)),
            scratch_shapes=[pltpu.VMEM((1, C), jnp.float32)],
        ),
        compiler_params=compiler(("parallel", "arbitrary")),
        cost_estimate=cost_pool,
    )(x_flat, w1_in, b1_row, w2_in, b2_row)

    cost_scale = pl.CostEstimate(
        flops=B * C * HW,
        transcendentals=0,
        bytes_accessed=2 * B * C * HW * itemsize + B * C * 4,
    )
    out_flat = pl.pallas_call(
        _scale_kernel,
        out_shape=jax.ShapeDtypeStruct((B, C, HW), x.dtype),
        grid_spec=pltpu.PrefetchScalarGridSpec(
            num_scalar_prefetch=0,
            grid=(B, n_hw),
            in_specs=[
                pl.BlockSpec((1, C, hw_t), lambda b, t: (b, 0, t)),
                pl.BlockSpec((1, C, 1), lambda b, t: (b, 0, 0)),
            ],
            out_specs=pl.BlockSpec((1, C, hw_t), lambda b, t: (b, 0, t)),
        ),
        compiler_params=compiler(("parallel", "parallel")),
        cost_estimate=cost_scale,
        input_output_aliases=aliases,
    )(x_flat, gate)
    return out_flat.reshape(B, C, H, W)


# ----------------------------------------------------------------------------- reference
def _reference(x, w1, b1, w2, b2):
    y = x.mean(axis=(2, 3))                                  # (B, C)
    h = jnp.maximum(y @ w1.T + b1, 0.0)                      # (B, HID)
    s = jax.nn.sigmoid(h @ w2.T + b2)                        # (B, C)
    return x * s[:, :, None, None]


if __name__ == "__main__":
    def run_case(B, C, H, W, **kw):
        HID = max(1, C // 16)
        key = jax.random.PRNGKey(0)
        kx, k1, k2, k3, k4 = jax.random.split(key, 5)
        x = jax.random.normal(kx, (B, C, H, W), dtype=jnp.float32)
        w1 = jax.random.normal(k1, (HID, C), dtype=jnp.float32) * 0.1
        b1 = jax.random.normal(k2, (HID,), dtype=jnp.float32) * 0.1
        w2 = jax.random.normal(k3, (C, HID), dtype=jnp.float32) * 0.1
        b2 = jax.random.normal(k4, (C,), dtype=jnp.float32) * 0.1

        out = jax.block_until_ready(knowledge_attention(x, w1, b1, w2, b2, **kw))
        ref = _reference(x, w1, b1, w2, b2)
        assert out.shape == (B, C, H, W)
        assert jnp.allclose(out, ref, atol=2e-5, rtol=2e-5), f"mismatch vs reference {kw}"

    # 1) default single-pass path (VPU FCs), HW a multiple of 128.
    run_case(2, 64, 16, 16)
    # 2) HW-tiled two-pass fallback with a masked partial last tile (HW=400, tile=128).
    run_case(2, 64, 20, 20, force_tiled=True, hw_tile=128)
    # 3) MXU FC path (normally taken for C >= 512), forced at small shape for coverage.
    run_case(2, 64, 16, 16, force_mxu=True)

    print("KERNEL_OK")
</pallas_src>

<mosaic_0001>
module attributes {stable_mosaic.version = 11 : i64} {
  func.func @_se_kernel(%arg0: i32, %arg1: memref<2x64x256xf32, #tpu.memory_space<vmem>>, %arg2: memref<4x64xf32, #tpu.memory_space<vmem>>, %arg3: memref<1x4xf32, #tpu.memory_space<vmem>>, %arg4: memref<4x64xf32, #tpu.memory_space<vmem>>, %arg5: memref<1x64xf32, #tpu.memory_space<vmem>>, %arg6: memref<2x64x256xf32, #tpu.memory_space<vmem>>) attributes {dimension_semantics = [#tpu.dimension_semantics<parallel>], iteration_bounds = array<i64: 1>, scalar_prefetch = 0 : i64, scratch_operands = 0 : i64, tpu.core_type = #tpu.core_type<tc>, window_params = [{transform_indices = @transform_0, window_bounds = array<i64: 2, 64, 256>}, {pipeline_mode = #tpu.pipeline_mode<synchronous>, transform_indices = @transform_1, window_bounds = array<i64: 4, 64>}, {pipeline_mode = #tpu.pipeline_mode<synchronous>, transform_indices = @transform_2, window_bounds = array<i64: 1, 4>}, {pipeline_mode = #tpu.pipeline_mode<synchronous>, transform_indices = @transform_3, window_bounds = array<i64: 4, 64>}, {pipeline_mode = #tpu.pipeline_mode<synchronous>, transform_indices = @transform_4, window_bounds = array<i64: 1, 64>}, {transform_indices = @transform_5, window_bounds = array<i64: 2, 64, 256>}]} {
    %c0 = arith.constant 0 : index
    %c0_0 = arith.constant 0 : index
    %c0_1 = arith.constant 0 : index
    %0 = vector.load %arg1[%c0, %c0_0, %c0_1] : memref<2x64x256xf32, #tpu.memory_space<vmem>>, vector<2x64x256xf32>
    %cst = arith.constant dense<0.000000e+00> : vector<2x64xf32>
    %1 = vector.multi_reduction <add>, %0, %cst [2] : vector<2x64x256xf32> to vector<2x64xf32>
    %cst_2 = arith.constant 3.906250e-03 : f32
    %2 = vector.broadcast %cst_2 : f32 to vector<2x64xf32>
    %3 = arith.mulf %1, %2 : vector<2x64xf32>
    %c0_3 = arith.constant 0 : index
    %c0_4 = arith.constant 0 : index
    %4 = vector.load %arg2[%c0_3, %c0_4] : memref<4x64xf32, #tpu.memory_space<vmem>>, vector<4x64xf32>
    %5 = vector.shape_cast %3 : vector<2x64xf32> to vector<2x1x64xf32>
    %6 = vector.shape_cast %4 : vector<4x64xf32> to vector<1x4x64xf32>
    %7 = vector.broadcast %5 : vector<2x1x64xf32> to vector<2x4x64xf32>
    %8 = vector.broadcast %6 : vector<1x4x64xf32> to vector<2x4x64xf32>
    %9 = arith.mulf %7, %8 : vector<2x4x64xf32>
    %cst_5 = arith.constant dense<0.000000e+00> : vector<2x4xf32>
    %10 = vector.multi_reduction <add>, %9, %cst_5 [2] : vector<2x4x64xf32> to vector<2x4xf32>
    %c0_6 = arith.constant 0 : index
    %c0_7 = arith.constant 0 : index
    %11 = vector.load %arg3[%c0_6, %c0_7] : memref<1x4xf32, #tpu.memory_space<vmem>>, vector<1x4xf32>
    %12 = vector.broadcast %11 : vector<1x4xf32> to vector<2x4xf32>
    %13 = arith.addf %10, %12 : vector<2x4xf32>
    %cst_8 = arith.constant 0.000000e+00 : f32
    %14 = vector.broadcast %cst_8 : f32 to vector<2x4xf32>
    %15 = arith.maximumf %13, %14 : vector<2x4xf32>
    %c0_9 = arith.constant 0 : index
    %c0_10 = arith.constant 0 : index
    %16 = vector.load %arg4[%c0_9, %c0_10] : memref<4x64xf32, #tpu.memory_space<vmem>>, vector<4x64xf32>
    %cst_11 = arith.constant 0.000000e+00 : f32
    %17 = vector.broadcast %cst_11 : f32 to vector<2x64xf32>
    %18 = vector.extract_strided_slice %15 {offsets = [0, 0], sizes = [2, 1], strides = [1, 1]} : vector<2x4xf32> to vector<2x1xf32>
    %19 = vector.extract_strided_slice %16 {offsets = [0, 0], sizes = [1, 64], strides = [1, 1]} : vector<4x64xf32> to vector<1x64xf32>
    %20 = vector.broadcast %18 : vector<2x1xf32> to vector<2x64xf32>
    %21 = vector.broadcast %19 : vector<1x64xf32> to vector<2x64xf32>
    %22 = arith.mulf %20, %21 : vector<2x64xf32>
    %23 = arith.addf %17, %22 : vector<2x64xf32>
    %24 = vector.extract_strided_slice %15 {offsets = [0, 1], sizes = [2, 1], strides = [1, 1]} : vector<2x4xf32> to vector<2x1xf32>
    %25 = vector.extract_strided_slice %16 {offsets = [1, 0], sizes = [1, 64], strides = [1, 1]} : vector<4x64xf32> to vector<1x64xf32>
    %26 = vector.broadcast %24 : vector<2x1xf32> to vector<2x64xf32>
    %27 = vector.broadcast %25 : vector<1x64xf32> to vector<2x64xf32>
    %28 = arith.mulf %26, %27 : vector<2x64xf32>
    %29 = arith.addf %23, %28 : vector<2x64xf32>
    %30 = vector.extract_strided_slice %15 {offsets = [0, 2], sizes = [2, 1], strides = [1, 1]} : vector<2x4xf32> to vector<2x1xf32>
    %31 = vector.extract_strided_slice %16 {offsets = [2, 0], sizes = [1, 64], strides = [1, 1]} : vector<4x64xf32> to vector<1x64xf32>
    %32 = vector.broadcast %30 : vector<2x1xf32> to vector<2x64xf32>
    %33 = vector.broadcast %31 : vector<1x64xf32> to vector<2x64xf32>
    %34 = arith.mulf %32, %33 : vector<2x64xf32>
    %35 = arith.addf %29, %34 : vector<2x64xf32>
    %36 = vector.extract_strided_slice %15 {offsets = [0, 3], sizes = [2, 1], strides = [1, 1]} : vector<2x4xf32> to vector<2x1xf32>
    %37 = vector.extract_strided_slice %16 {offsets = [3, 0], sizes = [1, 64], strides = [1, 1]} : vector<4x64xf32> to vector<1x64xf32>
    %38 = vector.broadcast %36 : vector<2x1xf32> to vector<2x64xf32>
    %39 = vector.broadcast %37 : vector<1x64xf32> to vector<2x64xf32>
    %40 = arith.mulf %38, %39 : vector<2x64xf32>
    %41 = arith.addf %35, %40 : vector<2x64xf32>
    %c0_12 = arith.constant 0 : index
    %c0_13 = arith.constant 0 : index
    %42 = vector.load %arg5[%c0_12, %c0_13] : memref<1x64xf32, #tpu.memory_space<vmem>>, vector<1x64xf32>
    %43 = vector.broadcast %42 : vector<1x64xf32> to vector<2x64xf32>
    %44 = arith.addf %41, %43 : vector<2x64xf32>
    %45 = arith.negf %44 : vector<2x64xf32>
    %46 = math.exp %45 : vector<2x64xf32>
    %cst_14 = arith.constant 1.000000e+00 : f32
    %47 = vector.broadcast %cst_14 : f32 to vector<2x64xf32>
    %48 = arith.addf %47, %46 : vector<2x64xf32>
    %49 = arith.divf %47, %48 : vector<2x64xf32>
    %c0_15 = arith.constant 0 : index
    %c0_16 = arith.constant 0 : index
    %c0_17 = arith.constant 0 : index
    %50 = vector.load %arg1[%c0_15, %c0_16, %c0_17] : memref<2x64x256xf32, #tpu.memory_space<vmem>>, vector<2x64x256xf32>
    %51 = vector.shape_cast %49 : vector<2x64xf32> to vector<2x64x1xf32>
    %52 = vector.broadcast %51 : vector<2x64x1xf32> to vector<2x64x256xf32>
    %53 = arith.mulf %50, %52 : vector<2x64x256xf32>
    %c0_18 = arith.constant 0 : index
    %c0_19 = arith.constant 0 : index
    %c0_20 = arith.constant 0 : index
    %54 = vector.load %arg6[%c0_18, %c0_19, %c0_20] : memref<2x64x256xf32, #tpu.memory_space<vmem>>, vector<2x64x256xf32>
    tpu.vector_store %arg6[%c0_18, %c0_19, %c0_20], %53 {strides = array<i32>} : memref<2x64x256xf32, #tpu.memory_space<vmem>>, vector<2x64x256xf32>,
    return
  }
  func.func @transform_0(%arg0: i32) -> (i32, i32, i32) {
    %c0_i32 = arith.constant 0 : i32
    %c0_i32_0 = arith.constant 0 : i32
    %c0_i32_1 = arith.constant 0 : i32
    return %arg0, %c0_i32, %c0_i32_0 : i32, i32, i32
  }
  func.func @transform_1(%arg0: i32) -> (i32, i32) {
    %c0_i32 = arith.constant 0 : i32
    %c0_i32_0 = arith.constant 0 : i32
    %c0_i32_1 = arith.constant 0 : i32
    return %c0_i32, %c0_i32_0 : i32, i32
  }
  func.func @transform_2(%arg0: i32) -> (i32, i32) {
    %c0_i32 = arith.constant 0 : i32
    %c0_i32_0 = arith.constant 0 : i32
    %c0_i32_1 = arith.constant 0 : i32
    return %c0_i32, %c0_i32_0 : i32, i32
  }
  func.func @transform_3(%arg0: i32) -> (i32, i32) {
    %c0_i32 = arith.constant 0 : i32
    %c0_i32_0 = arith.constant 0 : i32
    %c0_i32_1 = arith.constant 0 : i32
    return %c0_i32, %c0_i32_0 : i32, i32
  }
  func.func @transform_4(%arg0: i32) -> (i32, i32) {
    %c0_i32 = arith.constant 0 : i32
    %c0_i32_0 = arith.constant 0 : i32
    %c0_i32_1 = arith.constant 0 : i32
    return %c0_i32, %c0_i32_0 : i32, i32
  }
  func.func @transform_5(%arg0: i32) -> (i32, i32, i32) {
    %c0_i32 = arith.constant 0 : i32
    %c0_i32_0 = arith.constant 0 : i32
    %c0_i32_1 = arith.constant 0 : i32
    return %arg0, %c0_i32, %c0_i32_0 : i32, i32, i32
  }
}

</mosaic_0001>

<llo_original>
// kernel: tpu_custom_call.1
$region0: #{tpu_custom_call.1}
  #allocation0 [shape = 'u32[]', space=smem, size = 0x4, offset = 0x4, fixed_abs, tag = 'smem constant byte address 0x4 - core index']
  #allocation1 [shape = 'u32[144,128]{1,0:T(1,128)}', space=vmem, size = 0x12000, scoped, tag = 'internal scratch']
  %s0 = inlined_call_operand.hbm [shape: f32[2,64,256], index: 0, kind: input, shape index: {}]
  %s1 = inlined_call_operand.hbm [shape: f32[4,64], index: 1, kind: input, shape index: {}]
  %s2 = inlined_call_operand.hbm [shape: f32[1,4], index: 2, kind: input, shape index: {}]
  %s3 = inlined_call_operand.hbm [shape: f32[4,64], index: 3, kind: input, shape index: {}]
  %s4 = inlined_call_operand.hbm [shape: f32[1,64], index: 4, kind: input, shape index: {}]
  %s5 = inlined_call_operand.hbm [shape: f32[2,64,256], index: 5, kind: output, shape index: {}]
  %s6 = sld [smem:[#allocation0]]
  $region50: #{tpu_custom_call.1} parent=0
    _
  %s8 = ssub.s32 1, %s6
  %s9 = scalar_select 0, %s8, %s6
  $region1: #{tpu_custom_call.1} parent=0
    #allocation2 [shape = 'u8[131072]{0}', space=vmem, size = 0x20000, scoped, tag = 'input window, operand 0, single buffered']
    #allocation3 [shape = 's32[1]{0}', space=sflag, size = 0x4, scoped, tag = 'scoped memory for tpu_custom_call.1']
    #allocation4 [shape = 's32[1]{0}', space=sflag, size = 0x4, scoped, tag = 'scoped memory for tpu_custom_call.1']
    #allocation5 [shape = 'u8[2048]{0}', space=vmem, size = 0x800, scoped, tag = 'input window, operand 1, single buffered']
    #allocation6 [shape = 's32[1]{0}', space=sflag, size = 0x4, scoped, tag = 'scoped memory for tpu_custom_call.1']
    #allocation7 [shape = 'u8[512]{0}', space=vmem, size = 0x400, scoped, tag = 'input window, operand 2, single buffered']
    #allocation8 [shape = 'u8[2048]{0}', space=vmem, size = 0x800, scoped, tag = 'input window, operand 3, single buffered']
    #allocation9 [shape = 's32[1]{0}', space=sflag, size = 0x4, scoped, tag = 'scoped memory for tpu_custom_call.1']
    #allocation10 [shape = 'u8[512]{0}', space=vmem, size = 0x400, scoped, tag = 'input window, operand 4, single buffered']
    #allocation11 [shape = 'u8[131072]{0}', space=vmem, size = 0x20000, scoped, tag = 'output window, operand 0, single buffered']
    %10 = vsyncpa [#allocation3], 0
    %11 = vsyncpa [#allocation6], 0
    %12 = vsyncpa [#allocation9], 0
    %13 = vsyncpa [#allocation4], 0
    // Predicated region
    $region2: #{tpu_custom_call.1} parent=1 // pred_check
      _
    $region3: #{tpu_custom_call.1} parent=1 // pred_check_branch
      %15 = sbr.rel (0) target = $region5
    $region4: #{tpu_custom_call.1} parent=1 // pred_region
      %s17 = ssub.s32 4096, 4096
      %18 = vsyncadd [#allocation3], %s17
      %s19 = sshll.u32 [#allocation2], 4
      %s20 = int_to_ptr.vmem [resolvable:$true] %s19
      %25 = dma.hbm_to_vmem [thread:$0]  %s0, 4096, %s20, [#allocation3], 256, 256, 16
    $region5: #{tpu_custom_call.1} parent=1 // pred_fallthru
      _
    // Predicated region
    $region6: #{tpu_custom_call.1} parent=1 // pred_check
      _
    $region7: #{tpu_custom_call.1} parent=1 // pred_check_branch
      %27 = sbr.rel (0) target = $region9
    $region8: #{tpu_custom_call.1} parent=1 // pred_region
      %s29 = ssub.s32 64, 64
      %30 = vsyncadd [#allocation6], %s29
      %s32 = sshll.u32 [#allocation5], 4
      %s33 = int_to_ptr.vmem [resolvable:$true] %s32
      %35 = dma.hbm_to_vmem [thread:$0]  %s1, 64, %s33, [#allocation6]
    $region9: #{tpu_custom_call.1} parent=1 // pred_fallthru
      _
    // Predicated region
    $region10: #{tpu_custom_call.1} parent=1 // pred_check
      _
    $region11: #{tpu_custom_call.1} parent=1 // pred_check_branch
      %37 = sbr.rel (0) target = $region13
    $region12: #{tpu_custom_call.1} parent=1 // pred_region
      %s39 = ssub.s32 16, 16
      %40 = vsyncadd [#allocation6], %s39
      %s42 = sshll.u32 [#allocation7], 4
      %s43 = int_to_ptr.vmem [resolvable:$true] %s42
      %45 = dma.hbm_to_vmem [thread:$0]  %s2, 16, %s43, [#allocation6]
    $region13: #{tpu_custom_call.1} parent=1 // pred_fallthru
      _
    // Predicated region
    $region14: #{tpu_custom_call.1} parent=1 // pred_check
      _
    $region15: #{tpu_custom_call.1} parent=1 // pred_check_branch
      %47 = sbr.rel (0) target = $region17
    $region16: #{tpu_custom_call.1} parent=1 // pred_region
      %s49 = ssub.s32 64, 64
      %50 = vsyncadd [#allocation9], %s49
      %s52 = sshll.u32 [#allocation8], 4
      %s53 = int_to_ptr.vmem [resolvable:$true] %s52
      %55 = dma.hbm_to_vmem [thread:$0]  %s3, 64, %s53, [#allocation9]
    $region17: #{tpu_custom_call.1} parent=1 // pred_fallthru
      _
    // Predicated region
    $region18: #{tpu_custom_call.1} parent=1 // pred_check
      _
    $region19: #{tpu_custom_call.1} parent=1 // pred_check_branch
      %57 = sbr.rel (0) target = $region21
    $region20: #{tpu_custom_call.1} parent=1 // pred_region
      %s59 = ssub.s32 16, 16
      %60 = vsyncadd [#allocation9], %s59
      %s62 = sshll.u32 [#allocation10], 4
      %s63 = int_to_ptr.vmem [resolvable:$true] %s62
      %65 = dma.hbm_to_vmem [thread:$0]  %s4, 16, %s63, [#allocation9]
    $region21: #{tpu_custom_call.1} parent=1 // pred_fallthru
      _
    // Predicated region
    $region22: #{tpu_custom_call.1} parent=1 // pred_check
      _
    $region23: #{tpu_custom_call.1} parent=1 // pred_check_branch
      %67 = sbr.rel (0) target = $region25
    $region24: #{tpu_custom_call.1} parent=1 // pred_region
      %68 = dma.done [#allocation3], 4096
    $region25: #{tpu_custom_call.1} parent=1 // pred_fallthru
      _
    // Predicated region
    $region26: #{tpu_custom_call.1} parent=1 // pred_check
      _
    $region27: #{tpu_custom_call.1} parent=1 // pred_check_branch
      %70 = sbr.rel (0) target = $region29
    $region28: #{tpu_custom_call.1} parent=1 // pred_region
      %71 = dma.done [#allocation6], 64
    $region29: #{tpu_custom_call.1} parent=1 // pred_fallthru
      _
    // Predicated region
    $region30: #{tpu_custom_call.1} parent=1 // pred_check
      _
    $region31: #{tpu_custom_call.1} parent=1 // pred_check_branch
      %73 = sbr.rel (0) target = $region33
    $region32: #{tpu_custom_call.1} parent=1 // pred_region
      %74 = dma.done [#allocation6], 16
    $region33: #{tpu_custom_call.1} parent=1 // pred_fallthru
      _
    // Predicated region
    $region34: #{tpu_custom_call.1} parent=1 // pred_check
      _
    $region35: #{tpu_custom_call.1} parent=1 // pred_check_branch
      %76 = sbr.rel (0) target = $region37
    $region36: #{tpu_custom_call.1} parent=1 // pred_region
      %77 = dma.done [#allocation9], 64
    $region37: #{tpu_custom_call.1} parent=1 // pred_fallthru
      _
    // Predicated region
    $region38: #{tpu_custom_call.1} parent=1 // pred_check
      _
    $region39: #{tpu_custom_call.1} parent=1 // pred_check_branch
      %79 = sbr.rel (0) target = $region41
    $region40: #{tpu_custom_call.1} parent=1 // pred_region
      %80 = dma.done [#allocation9], 16
    $region41: #{tpu_custom_call.1} parent=1 // pred_fallthru
      _
    %v81 = vld [vmem:[#allocation2] sm:$0xff]
    %v82 = vld [vmem:[#allocation2 + $0x8] sm:$0xff]
    %v83 = vld [vmem:[#allocation2 + $0x10] sm:$0xff]
    %v84 = vld [vmem:[#allocation2 + $0x18] sm:$0xff]
    %v85 = vld [vmem:[#allocation2 + $0x20] sm:$0xff]
    %v86 = vld [vmem:[#allocation2 + $0x28] sm:$0xff]
    %v87 = vld [vmem:[#allocation2 + $0x30] sm:$0xff]
    %v88 = vld [vmem:[#allocation2 + $0x38] sm:$0xff]
    %v89 = vld [vmem:[#allocation2 + $0x40] sm:$0xff]
    %v90 = vld [vmem:[#allocation2 + $0x48] sm:$0xff]
    %v91 = vld [vmem:[#allocation2 + $0x50] sm:$0xff]
    %v92 = vld [vmem:[#allocation2 + $0x58] sm:$0xff]
    %v93 = vld [vmem:[#allocation2 + $0x60] sm:$0xff]
    %v94 = vld [vmem:[#allocation2 + $0x68] sm:$0xff]
    %v95 = vld [vmem:[#allocation2 + $0x70] sm:$0xff]
    %v96 = vld [vmem:[#allocation2 + $0x78] sm:$0xff]
    %v97 = vld [vmem:[#allocation2 + $0x80] sm:$0xff]
    %v98 = vld [vmem:[#allocation2 + $0x88] sm:$0xff]
    %v99 = vld [vmem:[#allocation2 + $0x90] sm:$0xff]
    %v100 = vld [vmem:[#allocation2 + $0x98] sm:$0xff]
    %v101 = vld [vmem:[#allocation2 + $0xa0] sm:$0xff]
    %v102 = vld [vmem:[#allocation2 + $0xa8] sm:$0xff]
    %v103 = vld [vmem:[#allocation2 + $0xb0] sm:$0xff]
    %v104 = vld [vmem:[#allocation2 + $0xb8] sm:$0xff]
    %v105 = vld [vmem:[#allocation2 + $0xc0] sm:$0xff]
    %v106 = vld [vmem:[#allocation2 + $0xc8] sm:$0xff]
    %v107 = vld [vmem:[#allocation2 + $0xd0] sm:$0xff]
    %v108 = vld [vmem:[#allocation2 + $0xd8] sm:$0xff]
    %v109 = vld [vmem:[#allocation2 + $0xe0] sm:$0xff]
    %v110 = vld [vmem:[#allocation2 + $0xe8] sm:$0xff]
    %v111 = vld [vmem:[#allocation2 + $0xf0] sm:$0xff]
    %v112 = vld [vmem:[#allocation2 + $0xf8] sm:$0xff]
    %v113 = vadd.f32 %v81, %v82
    %114 = vadd.xlane.f32.xlu0 %v113
    %v115 = vpop.xlane.xlu0 %114
    %v116 = vadd.f32 %v83, %v84
    %117 = vadd.xlane.f32.xlu0 %v116
    %v118 = vpop.xlane.xlu0 %117
    %v119 = vadd.f32 %v85, %v86
    %120 = vadd.xlane.f32.xlu0 %v119
    %v121 = vpop.xlane.xlu0 %120
    %v122 = vadd.f32 %v87, %v88
    %123 = vadd.xlane.f32.xlu0 %v122
    %v124 = vpop.xlane.xlu0 %123
    %v125 = vadd.f32 %v89, %v90
    %126 = vadd.xlane.f32.xlu0 %v125
    %v127 = vpop.xlane.xlu0 %126
    %v128 = vadd.f32 %v91, %v92
    %129 = vadd.xlane.f32.xlu0 %v128
    %v130 = vpop.xlane.xlu0 %129
    %v131 = vadd.f32 %v93, %v94
    %132 = vadd.xlane.f32.xlu0 %v131
    %v133 = vpop.xlane.xlu0 %132
    %v134 = vadd.f32 %v95, %v96
    %135 = vadd.xlane.f32.xlu0 %v134
    %v136 = vpop.xlane.xlu0 %135
    %v137 = vadd.f32 %v97, %v98
    %138 = vadd.xlane.f32.xlu0 %v137
    %v139 = vpop.xlane.xlu0 %138
    %v140 = vadd.f32 %v99, %v100
    %141 = vadd.xlane.f32.xlu0 %v140
    %v142 = vpop.xlane.xlu0 %141
    %v143 = vadd.f32 %v101, %v102
    %144 = vadd.xlane.f32.xlu0 %v143
    %v145 = vpop.xlane.xlu0 %144
    %v146 = vadd.f32 %v103, %v104
    %147 = vadd.xlane.f32.xlu0 %v146
    %v148 = vpop.xlane.xlu0 %147
    %v149 = vadd.f32 %v105, %v106
    %150 = vadd.xlane.f32.xlu0 %v149
    %v151 = vpop.xlane.xlu0 %150
    %v152 = vadd.f32 %v107, %v108
    %153 = vadd.xlane.f32.xlu0 %v152
    %v154 = vpop.xlane.xlu0 %153
    %v155 = vadd.f32 %v109, %v110
    %156 = vadd.xlane.f32.xlu0 %v155
    %v157 = vpop.xlane.xlu0 %156
    %v158 = vadd.f32 %v111, %v112
    %159 = vadd.xlane.f32.xlu0 %v158
    %v160 = vpop.xlane.xlu0 %159
    %v161 = vmul.f32 %v115, 0.00390625
    %v162 = vmul.f32 %v118, 0.00390625
    %v163 = vmul.f32 %v121, 0.00390625
    %v164 = vmul.f32 %v124, 0.00390625
    %v165 = vmul.f32 %v127, 0.00390625
    %v166 = vmul.f32 %v130, 0.00390625
    %v167 = vmul.f32 %v133, 0.00390625
    %v168 = vmul.f32 %v136, 0.00390625
    %v169 = vmul.f32 %v139, 0.00390625
    %v170 = vmul.f32 %v142, 0.00390625
    %v171 = vmul.f32 %v145, 0.00390625
    %v172 = vmul.f32 %v148, 0.00390625
    %v173 = vmul.f32 %v151, 0.00390625
    %v174 = vmul.f32 %v154, 0.00390625
    %v175 = vmul.f32 %v157, 0.00390625
    %v176 = vmul.f32 %v160, 0.00390625
    %v177 = vld [vmem:[#allocation5] sm:$0xf]
    %v179 = vlaneseq
    %v180 = vshrl.u32 %v179, 7
    %v181 = vsub.s32 0, %v180
    %v182 = vrot.slane %v177, %v181
    %184 = vbcast.lane.b32.xlu0 %v182, 256
    %v185 = vpop.permute.xlu0 %184
    %s187 = sor.u32 256, 8
    %188 = vbcast.lane.b32.xlu0 %v182, %s187
    %v189 = vpop.permute.xlu0 %188
    %s191 = sor.u32 256, 16
    %192 = vbcast.lane.b32.xlu0 %v182, %s191
    %v193 = vpop.permute.xlu0 %192
    %s195 = sor.u32 256, 24
    %196 = vbcast.lane.b32.xlu0 %v182, %s195
    %v197 = vpop.permute.xlu0 %196
    %s199 = sor.u32 256, 32
    %200 = vbcast.lane.b32.xlu0 %v182, %s199
    %v201 = vpop.permute.xlu0 %200
    %s203 = sor.u32 256, 40
    %204 = vbcast.lane.b32.xlu0 %v182, %s203
    %v205 = vpop.permute.xlu0 %204
    %s207 = sor.u32 256, 48
    %208 = vbcast.lane.b32.xlu0 %v182, %s207
    %v209 = vpop.permute.xlu0 %208
    %s211 = sor.u32 256, 56
    %212 = vbcast.lane.b32.xlu0 %v182, %s211
    %v213 = vpop.permute.xlu0 %212
    %v214 = vlaneseq
    %v215 = vshrl.u32 %v214, 7
    %v216 = vsub.s32 1, %v215
    %v217 = vrot.slane %v177, %v216
    %219 = vbcast.lane.b32.xlu0 %v217, 256
    %v220 = vpop.permute.xlu0 %219
    %s222 = sor.u32 256, 8
    %223 = vbcast.lane.b32.xlu0 %v217, %s222
    %v224 = vpop.permute.xlu0 %223
    %s226 = sor.u32 256, 16
    %227 = vbcast.lane.b32.xlu0 %v217, %s226
    %v228 = vpop.permute.xlu0 %227
    %s230 = sor.u32 256, 24
    %231 = vbcast.lane.b32.xlu0 %v217, %s230
    %v232 = vpop.permute.xlu0 %231
    %s234 = sor.u32 256, 32
    %235 = vbcast.lane.b32.xlu0 %v217, %s234
    %v236 = vpop.permute.xlu0 %235
    %s238 = sor.u32 256, 40
    %239 = vbcast.lane.b32.xlu0 %v217, %s238
    %v240 = vpop.permute.xlu0 %239
    %s242 = sor.u32 256, 48
    %243 = vbcast.lane.b32.xlu0 %v217, %s242
    %v244 = vpop.permute.xlu0 %243
    %s246 = sor.u32 256, 56
    %247 = vbcast.lane.b32.xlu0 %v217, %s246
    %v248 = vpop.permute.xlu0 %247
    %v249 = vlaneseq
    %v250 = vshrl.u32 %v249, 7
    %v251 = vsub.s32 2, %v250
    %v252 = vrot.slane %v177, %v251
    %254 = vbcast.lane.b32.xlu0 %v252, 256
    %v255 = vpop.permute.xlu0 %254
    %s257 = sor.u32 256, 8
    %258 = vbcast.lane.b32.xlu0 %v252, %s257
    %v259 = vpop.permute.xlu0 %258
    %s261 = sor.u32 256, 16
    %262 = vbcast.lane.b32.xlu0 %v252, %s261
    %v263 = vpop.permute.xlu0 %262
    %s265 = sor.u32 256, 24
    %266 = vbcast.lane.b32.xlu0 %v252, %s265
    %v267 = vpop.permute.xlu0 %266
    %s269 = sor.u32 256, 32
    %270 = vbcast.lane.b32.xlu0 %v252, %s269
    %v271 = vpop.permute.xlu0 %270
    %s273 = sor.u32 256, 40
    %274 = vbcast.lane.b32.xlu0 %v252, %s273
    %v275 = vpop.permute.xlu0 %274
    %s277 = sor.u32 256, 48
    %278 = vbcast.lane.b32.xlu0 %v252, %s277
    %v279 = vpop.permute.xlu0 %278
    %s281 = sor.u32 256, 56
    %282 = vbcast.lane.b32.xlu0 %v252, %s281
    %v283 = vpop.permute.xlu0 %282
    %v284 = vlaneseq
    %v285 = vshrl.u32 %v284, 7
    %v286 = vsub.s32 3, %v285
    %v287 = vrot.slane %v177, %v286
    %289 = vbcast.lane.b32.xlu0 %v287, 256
    %v290 = vpop.permute.xlu0 %289
    %s292 = sor.u32 256, 8
    %293 = vbcast.lane.b32.xlu0 %v287, %s292
    %v294 = vpop.permute.xlu0 %293
    %s296 = sor.u32 256, 16
    %297 = vbcast.lane.b32.xlu0 %v287, %s296
    %v298 = vpop.permute.xlu0 %297
    %s300 = sor.u32 256, 24
    %301 = vbcast.lane.b32.xlu0 %v287, %s300
    %v302 = vpop.permute.xlu0 %301
    %s304 = sor.u32 256, 32
    %305 = vbcast.lane.b32.xlu0 %v287, %s304
    %v306 = vpop.permute.xlu0 %305
    %s308 = sor.u32 256, 40
    %309 = vbcast.lane.b32.xlu0 %v287, %s308
    %v310 = vpop.permute.xlu0 %309
    %s312 = sor.u32 256, 48
    %313 = vbcast.lane.b32.xlu0 %v287, %s312
    %v314 = vpop.permute.xlu0 %313
    %s316 = sor.u32 256, 56
    %317 = vbcast.lane.b32.xlu0 %v287, %s316
    %v318 = vpop.permute.xlu0 %317
    %v351 = vmul.f32 %v161, %v185
    %v352 = vmul.f32 %v162, %v189
    %v353 = vmul.f32 %v163, %v193
    %v354 = vmul.f32 %v164, %v197
    %v355 = vmul.f32 %v165, %v201
    %v356 = vmul.f32 %v166, %v205
    %v357 = vmul.f32 %v167, %v209
    %v358 = vmul.f32 %v168, %v213
    %v359 = vmul.f32 %v161, %v220
    %v360 = vmul.f32 %v162, %v224
    %v361 = vmul.f32 %v163, %v228
    %v362 = vmul.f32 %v164, %v232
    %v363 = vmul.f32 %v165, %v236
    %v364 = vmul.f32 %v166, %v240
    %v365 = vmul.f32 %v167, %v244
    %v366 = vmul.f32 %v168, %v248
    %v367 = vmul.f32 %v161, %v255
    %v368 = vmul.f32 %v162, %v259
    %v369 = vmul.f32 %v163, %v263
    %v370 = vmul.f32 %v164, %v267
    %v371 = vmul.f32 %v165, %v271
    %v372 = vmul.f32 %v166, %v275
    %v373 = vmul.f32 %v167, %v279
    %v374 = vmul.f32 %v168, %v283
    %v375 = vmul.f32 %v161, %v290
    %v376 = vmul.f32 %v162, %v294
    %v377 = vmul.f32 %v163, %v298
    %v378 = vmul.f32 %v164, %v302
    %v379 = vmul.f32 %v165, %v306
    %v380 = vmul.f32 %v166, %v310
    %v381 = vmul.f32 %v167, %v314
    %v382 = vmul.f32 %v168, %v318
    %v383 = vmul.f32 %v169, %v185
    %v384 = vmul.f32 %v170, %v189
    %v385 = vmul.f32 %v171, %v193
    %v386 = vmul.f32 %v172, %v197
    %v387 = vmul.f32 %v173, %v201
    %v388 = vmul.f32 %v174, %v205
    %v389 = vmul.f32 %v175, %v209
    %v390 = vmul.f32 %v176, %v213
    %v391 = vmul.f32 %v169, %v220
    %v392 = vmul.f32 %v170, %v224
    %v393 = vmul.f32 %v171, %v228
    %v394 = vmul.f32 %v172, %v232
    %v395 = vmul.f32 %v173, %v236
    %v396 = vmul.f32 %v174, %v240
    %v397 = vmul.f32 %v175, %v244
    %v398 = vmul.f32 %v176, %v248
    %v399 = vmul.f32 %v169, %v255
    %v400 = vmul.f32 %v170, %v259
    %v401 = vmul.f32 %v171, %v263
    %v402 = vmul.f32 %v172, %v267
    %v403 = vmul.f32 %v173, %v271
    %v404 = vmul.f32 %v174, %v275
    %v405 = vmul.f32 %v175, %v279
    %v406 = vmul.f32 %v176, %v283
    %v407 = vmul.f32 %v169, %v290
    %v408 = vmul.f32 %v170, %v294
    %v409 = vmul.f32 %v171, %v298
    %v410 = vmul.f32 %v172, %v302
    %v411 = vmul.f32 %v173, %v306
    %v412 = vmul.f32 %v174, %v310
    %v413 = vmul.f32 %v175, %v314
    %v414 = vmul.f32 %v176, %v318
    %479 = vset.pattern.permute.xlu0 0
    %480 = vperm.xlu0 %479, %v351
    %v481 = vpop.permute.xlu0 %480
    %482 = vset.pattern.permute.xlu0 0
    %483 = vperm.xlu0 %482, %v352
    %v484 = vpop.permute.xlu0 %483
    %485 = vset.pattern.permute.xlu0 0
    %486 = vperm.xlu0 %485, %v353
    %v487 = vpop.permute.xlu0 %486
    %488 = vset.pattern.permute.xlu0 0
    %489 = vperm.xlu0 %488, %v354
    %v490 = vpop.permute.xlu0 %489
    %491 = vset.pattern.permute.xlu0 0
    %492 = vperm.xlu0 %491, %v355
    %v493 = vpop.permute.xlu0 %492
    %494 = vset.pattern.permute.xlu0 0
    %495 = vperm.xlu0 %494, %v356
    %v496 = vpop.permute.xlu0 %495
    %497 = vset.pattern.permute.xlu0 0
    %498 = vperm.xlu0 %497, %v357
    %v499 = vpop.permute.xlu0 %498
    %500 = vset.pattern.permute.xlu0 0
    %501 = vperm.xlu0 %500, %v358
    %v502 = vpop.permute.xlu0 %501
    %503 = vset.pattern.permute.xlu0 0
    %504 = vperm.xlu0 %503, %v359
    %v505 = vpop.permute.xlu0 %504
    %506 = vset.pattern.permute.xlu0 0
    %507 = vperm.xlu0 %506, %v360
    %v508 = vpop.permute.xlu0 %507
    %509 = vset.pattern.permute.xlu0 0
    %510 = vperm.xlu0 %509, %v361
    %v511 = vpop.permute.xlu0 %510
    %512 = vset.pattern.permute.xlu0 0
    %513 = vperm.xlu0 %512, %v362
    %v514 = vpop.permute.xlu0 %513
    %515 = vset.pattern.permute.xlu0 0
    %516 = vperm.xlu0 %515, %v363
    %v517 = vpop.permute.xlu0 %516
    %518 = vset.pattern.permute.xlu0 0
    %519 = vperm.xlu0 %518, %v364
    %v520 = vpop.permute.xlu0 %519
    %521 = vset.pattern.permute.xlu0 0
    %522 = vperm.xlu0 %521, %v365
    %v523 = vpop.permute.xlu0 %522
    %524 = vset.pattern.permute.xlu0 0
    %525 = vperm.xlu0 %524, %v366
    %v526 = vpop.permute.xlu0 %525
    %527 = vset.pattern.permute.xlu0 0
    %528 = vperm.xlu0 %527, %v367
    %v529 = vpop.permute.xlu0 %528
    %530 = vset.pattern.permute.xlu0 0
    %531 = vperm.xlu0 %530, %v368
    %v532 = vpop.permute.xlu0 %531
    %533 = vset.pattern.permute.xlu0 0
    %534 = vperm.xlu0 %533, %v369
    %v535 = vpop.permute.xlu0 %534
    %536 = vset.pattern.permute.xlu0 0
    %537 = vperm.xlu0 %536, %v370
    %v538 = vpop.permute.xlu0 %537
    %539 = vset.pattern.permute.xlu0 0
    %540 = vperm.xlu0 %539, %v371
    %v541 = vpop.permute.xlu0 %540
    %542 = vset.pattern.permute.xlu0 0
    %543 = vperm.xlu0 %542, %v372
    %v544 = vpop.permute.xlu0 %543
    %545 = vset.pattern.permute.xlu0 0
    %546 = vperm.xlu0 %545, %v373
    %v547 = vpop.permute.xlu0 %546
    %548 = vset.pattern.permute.xlu0 0
    %549 = vperm.xlu0 %548, %v374
    %v550 = vpop.permute.xlu0 %549
    %551 = vset.pattern.permute.xlu0 0
    %552 = vperm.xlu0 %551, %v375
    %v553 = vpop.permute.xlu0 %552
    %554 = vset.pattern.permute.xlu0 0
    %555 = vperm.xlu0 %554, %v376
    %v556 = vpop.permute.xlu0 %555
    %557 = vset.pattern.permute.xlu0 0
    %558 = vperm.xlu0 %557, %v377
    %v559 = vpop.permute.xlu0 %558
    %560 = vset.pattern.permute.xlu0 0
    %561 = vperm.xlu0 %560, %v378
    %v562 = vpop.permute.xlu0 %561
    %563 = vset.pattern.permute.xlu0 0
    %564 = vperm.xlu0 %563, %v379
    %v565 = vpop.permute.xlu0 %564
    %566 = vset.pattern.permute.xlu0 0
    %567 = vperm.xlu0 %566, %v380
    %v568 = vpop.permute.xlu0 %567
    %569 = vset.pattern.permute.xlu0 0
    %570 = vperm.xlu0 %569, %v381
    %v571 = vpop.permute.xlu0 %570
    %572 = vset.pattern.permute.xlu0 0
    %573 = vperm.xlu0 %572, %v382
    %v574 = vpop.permute.xlu0 %573
    %575 = vset.pattern.permute.xlu0 0
    %576 = vperm.xlu0 %575, %v383
    %v577 = vpop.permute.xlu0 %576
    %578 = vset.pattern.permute.xlu0 0
    %579 = vperm.xlu0 %578, %v384
    %v580 = vpop.permute.xlu0 %579
    %581 = vset.pattern.permute.xlu0 0
    %582 = vperm.xlu0 %581, %v385
    %v583 = vpop.permute.xlu0 %582
    %584 = vset.pattern.permute.xlu0 0
    %585 = vperm.xlu0 %584, %v386
    %v586 = vpop.permute.xlu0 %585
    %587 = vset.pattern.permute.xlu0 0
    %588 = vperm.xlu0 %587, %v387
    %v589 = vpop.permute.xlu0 %588
    %590 = vset.pattern.permute.xlu0 0
    %591 = vperm.xlu0 %590, %v388
    %v592 = vpop.permute.xlu0 %591
    %593 = vset.pattern.permute.xlu0 0
    %594 = vperm.xlu0 %593, %v389
    %v595 = vpop.permute.xlu0 %594
    %596 = vset.pattern.permute.xlu0 0
    %597 = vperm.xlu0 %596, %v390
    %v598 = vpop.permute.xlu0 %597
    %599 = vset.pattern.permute.xlu0 0
    %600 = vperm.xlu0 %599, %v391
    %v601 = vpop.permute.xlu0 %600
    %602 = vset.pattern.permute.xlu0 0
    %603 = vperm.xlu0 %602, %v392
    %v604 = vpop.permute.xlu0 %603
    %605 = vset.pattern.permute.xlu0 0
    %606 = vperm.xlu0 %605, %v393
    %v607 = vpop.permute.xlu0 %606
    %608 = vset.pattern.permute.xlu0 0
    %609 = vperm.xlu0 %608, %v394
    %v610 = vpop.permute.xlu0 %609
    %611 = vset.pattern.permute.xlu0 0
    %612 = vperm.xlu0 %611, %v395
    %v613 = vpop.permute.xlu0 %612
    %614 = vset.pattern.permute.xlu0 0
    %615 = vperm.xlu0 %614, %v396
    %v616 = vpop.permute.xlu0 %615
    %617 = vset.pattern.permute.xlu0 0
    %618 = vperm.xlu0 %617, %v397
    %v619 = vpop.permute.xlu0 %618
    %620 = vset.pattern.permute.xlu0 0
    %621 = vperm.xlu0 %620, %v398
    %v622 = vpop.permute.xlu0 %621
    %623 = vset.pattern.permute.xlu0 0
    %624 = vperm.xlu0 %623, %v399
    %v625 = vpop.permute.xlu0 %624
    %626 = vset.pattern.permute.xlu0 0
    %627 = vperm.xlu0 %626, %v400
    %v628 = vpop.permute.xlu0 %627
    %629 = vset.pattern.permute.xlu0 0
    %630 = vperm.xlu0 %629, %v401
    %v631 = vpop.permute.xlu0 %630
    %632 = vset.pattern.permute.xlu0 0
    %633 = vperm.xlu0 %632, %v402
    %v634 = vpop.permute.xlu0 %633
    %635 = vset.pattern.permute.xlu0 0
    %636 = vperm.xlu0 %635, %v403
    %v637 = vpop.permute.xlu0 %636
    %638 = vset.pattern.permute.xlu0 0
    %639 = vperm.xlu0 %638, %v404
    %v640 = vpop.permute.xlu0 %639
    %641 = vset.pattern.permute.xlu0 0
    %642 = vperm.xlu0 %641, %v405
    %v643 = vpop.permute.xlu0 %642
    %644 = vset.pattern.permute.xlu0 0
    %645 = vperm.xlu0 %644, %v406
    %v646 = vpop.permute.xlu0 %645
    %647 = vset.pattern.permute.xlu0 0
    %648 = vperm.xlu0 %647, %v407
    %v649 = vpop.permute.xlu0 %648
    %650 = vset.pattern.permute.xlu0 0
    %651 = vperm.xlu0 %650, %v408
    %v652 = vpop.permute.xlu0 %651
    %653 = vset.pattern.permute.xlu0 0
    %654 = vperm.xlu0 %653, %v409
    %v655 = vpop.permute.xlu0 %654
    %656 = vset.pattern.permute.xlu0 0
    %657 = vperm.xlu0 %656, %v410
    %v658 = vpop.permute.xlu0 %657
    %659 = vset.pattern.permute.xlu0 0
    %660 = vperm.xlu0 %659, %v411
    %v661 = vpop.permute.xlu0 %660
    %662 = vset.pattern.permute.xlu0 0
    %663 = vperm.xlu0 %662, %v412
    %v664 = vpop.permute.xlu0 %663
    %665 = vset.pattern.permute.xlu0 0
    %666 = vperm.xlu0 %665, %v413
    %v667 = vpop.permute.xlu0 %666
    %668 = vset.pattern.permute.xlu0 0
    %669 = vperm.xlu0 %668, %v414
    %v670 = vpop.permute.xlu0 %669
    %v671 = vlaneseq
    %v672 = vand.u32 %v671, 127
    %v673 = vlaneseq
    %v674 = vshrl.u32 %v673, 7
    %v675 = vsub.s32 %v672, %v674
    %v676 = vrot.slane %v481, %v675
    %v677 = vadd.s32 %v672, 4294967288
    %v678 = vlaneseq
    %v679 = vshrl.u32 %v678, 7
    %v680 = vsub.s32 %v677, %v679
    %v681 = vrot.slane %v484, %v680
    %vm682 = vcmask 130112
    %v683 = vsel %vm682, %v681, %v676
    %v684 = vadd.s32 %v672, 4294967280
    %v685 = vlaneseq
    %v686 = vshrl.u32 %v685, 7
    %v687 = vsub.s32 %v684, %v686
    %v688 = vrot.slane %v487, %v687
    %vm689 = vcmask 195712
    %v690 = vsel %vm689, %v688, %v683
    %v691 = vadd.s32 %v672, 4294967272
    %v692 = vlaneseq
    %v693 = vshrl.u32 %v692, 7
    %v694 = vsub.s32 %v691, %v693
    %v695 = vrot.slane %v490, %v694
    %vm696 = vcmask 261312
    %v697 = vsel %vm696, %v695, %v690
    %v698 = vadd.s32 %v672, 4294967264
    %v699 = vlaneseq
    %v700 = vshrl.u32 %v699, 7
    %v701 = vsub.s32 %v698, %v700
    %v702 = vrot.slane %v493, %v701
    %vm703 = vcmask 326912
    %v704 = vsel %vm703, %v702, %v697
    %v705 = vadd.s32 %v672, 4294967256
    %v706 = vlaneseq
    %v707 = vshrl.u32 %v706, 7
    %v708 = vsub.s32 %v705, %v707
    %v709 = vrot.slane %v496, %v708
    %vm710 = vcmask 392512
    %v711 = vsel %vm710, %v709, %v704
    %v712 = vadd.s32 %v672, 4294967248
    %v713 = vlaneseq
    %v714 = vshrl.u32 %v713, 7
    %v715 = vsub.s32 %v712, %v714
    %v716 = vrot.slane %v499, %v715
    %vm717 = vcmask 458112
    %v718 = vsel %vm717, %v716, %v711
    %v719 = vadd.s32 %v672, 4294967240
    %v720 = vlaneseq
    %v721 = vshrl.u32 %v720, 7
    %v722 = vsub.s32 %v719, %v721
    %v723 = vrot.slane %v502, %v722
    %vm724 = vcmask 523712
    %v725 = vsel %vm724, %v723, %v718
    %v726 = vlaneseq
    %v727 = vshrl.u32 %v726, 7
    %v728 = vsub.s32 %v672, %v727
    %v729 = vrot.slane %v505, %v728
    %v730 = vlaneseq
    %v731 = vshrl.u32 %v730, 7
    %v732 = vsub.s32 %v677, %v731
    %v733 = vrot.slane %v508, %v732
    %v734 = vsel %vm682, %v733, %v729
    %v735 = vlaneseq
    %v736 = vshrl.u32 %v735, 7
    %v737 = vsub.s32 %v684, %v736
    %v738 = vrot.slane %v511, %v737
    %v739 = vsel %vm689, %v738, %v734
    %v740 = vlaneseq
    %v741 = vshrl.u32 %v740, 7
    %v742 = vsub.s32 %v691, %v741
    %v743 = vrot.slane %v514, %v742
    %v744 = vsel %vm696, %v743, %v739
    %v745 = vlaneseq
    %v746 = vshrl.u32 %v745, 7
    %v747 = vsub.s32 %v698, %v746
    %v748 = vrot.slane %v517, %v747
    %v749 = vsel %vm703, %v748, %v744
    %v750 = vlaneseq
    %v751 = vshrl.u32 %v750, 7
    %v752 = vsub.s32 %v705, %v751
    %v753 = vrot.slane %v520, %v752
    %v754 = vsel %vm710, %v753, %v749
    %v755 = vlaneseq
    %v756 = vshrl.u32 %v755, 7
    %v757 = vsub.s32 %v712, %v756
    %v758 = vrot.slane %v523, %v757
    %v759 = vsel %vm717, %v758, %v754
    %v760 = vlaneseq
    %v761 = vshrl.u32 %v760, 7
    %v762 = vsub.s32 %v719, %v761
    %v763 = vrot.slane %v526, %v762
    %v764 = vsel %vm724, %v763, %v759
    %v765 = vlaneseq
    %v766 = vshrl.u32 %v765, 7
    %v767 = vsub.s32 %v672, %v766
    %v768 = vrot.slane %v529, %v767
    %v769 = vlaneseq
    %v770 = vshrl.u32 %v769, 7
    %v771 = vsub.s32 %v677, %v770
    %v772 = vrot.slane %v532, %v771
    %v773 = vsel %vm682, %v772, %v768
    %v774 = vlaneseq
    %v775 = vshrl.u32 %v774, 7
    %v776 = vsub.s32 %v684, %v775
    %v777 = vrot.slane %v535, %v776
    %v778 = vsel %vm689, %v777, %v773
    %v779 = vlaneseq
    %v780 = vshrl.u32 %v779, 7
    %v781 = vsub.s32 %v691, %v780
    %v782 = vrot.slane %v538, %v781
    %v783 = vsel %vm696, %v782, %v778
    %v784 = vlaneseq
    %v785 = vshrl.u32 %v784, 7
    %v786 = vsub.s32 %v698, %v785
    %v787 = vrot.slane %v541, %v786
    %v788 = vsel %vm703, %v787, %v783
    %v789 = vlaneseq
    %v790 = vshrl.u32 %v789, 7
    %v791 = vsub.s32 %v705, %v790
    %v792 = vrot.slane %v544, %v791
    %v793 = vsel %vm710, %v792, %v788
    %v794 = vlaneseq
    %v795 = vshrl.u32 %v794, 7
    %v796 = vsub.s32 %v712, %v795
    %v797 = vrot.slane %v547, %v796
    %v798 = vsel %vm717, %v797, %v793
    %v799 = vlaneseq
    %v800 = vshrl.u32 %v799, 7
    %v801 = vsub.s32 %v719, %v800
    %v802 = vrot.slane %v550, %v801
    %v803 = vsel %vm724, %v802, %v798
    %v804 = vlaneseq
    %v805 = vshrl.u32 %v804, 7
    %v806 = vsub.s32 %v672, %v805
    %v807 = vrot.slane %v553, %v806
    %v808 = vlaneseq
    %v809 = vshrl.u32 %v808, 7
    %v810 = vsub.s32 %v677, %v809
    %v811 = vrot.slane %v556, %v810
    %v812 = vsel %vm682, %v811, %v807
    %v813 = vlaneseq
    %v814 = vshrl.u32 %v813, 7
    %v815 = vsub.s32 %v684, %v814
    %v816 = vrot.slane %v559, %v815
    %v817 = vsel %vm689, %v816, %v812
    %v818 = vlaneseq
    %v819 = vshrl.u32 %v818, 7
    %v820 = vsub.s32 %v691, %v819
    %v821 = vrot.slane %v562, %v820
    %v822 = vsel %vm696, %v821, %v817
    %v823 = vlaneseq
    %v824 = vshrl.u32 %v823, 7
    %v825 = vsub.s32 %v698, %v824
    %v826 = vrot.slane %v565, %v825
    %v827 = vsel %vm703, %v826, %v822
    %v828 = vlaneseq
    %v829 = vshrl.u32 %v828, 7
    %v830 = vsub.s32 %v705, %v829
    %v831 = vrot.slane %v568, %v830
    %v832 = vsel %vm710, %v831, %v827
    %v833 = vlaneseq
    %v834 = vshrl.u32 %v833, 7
    %v835 = vsub.s32 %v712, %v834
    %v836 = vrot.slane %v571, %v835
    %v837 = vsel %vm717, %v836, %v832
    %v838 = vlaneseq
    %v839 = vshrl.u32 %v838, 7
    %v840 = vsub.s32 %v719, %v839
    %v841 = vrot.slane %v574, %v840
    %v842 = vsel %vm724, %v841, %v837
    %v843 = vlaneseq
    %v844 = vshrl.u32 %v843, 7
    %v845 = vsub.s32 %v672, %v844
    %v846 = vrot.slane %v577, %v845
    %v847 = vlaneseq
    %v848 = vshrl.u32 %v847, 7
    %v849 = vsub.s32 %v677, %v848
    %v850 = vrot.slane %v580, %v849
    %v851 = vsel %vm682, %v850, %v846
    %v852 = vlaneseq
    %v853 = vshrl.u32 %v852, 7
    %v854 = vsub.s32 %v684, %v853
    %v855 = vrot.slane %v583, %v854
    %v856 = vsel %vm689, %v855, %v851
    %v857 = vlaneseq
    %v858 = vshrl.u32 %v857, 7
    %v859 = vsub.s32 %v691, %v858
    %v860 = vrot.slane %v586, %v859
    %v861 = vsel %vm696, %v860, %v856
    %v862 = vlaneseq
    %v863 = vshrl.u32 %v862, 7
    %v864 = vsub.s32 %v698, %v863
    %v865 = vrot.slane %v589, %v864
    %v866 = vsel %vm703, %v865, %v861
    %v867 = vlaneseq
    %v868 = vshrl.u32 %v867, 7
    %v869 = vsub.s32 %v705, %v868
    %v870 = vrot.slane %v592, %v869
    %v871 = vsel %vm710, %v870, %v866
    %v872 = vlaneseq
    %v873 = vshrl.u32 %v872, 7
    %v874 = vsub.s32 %v712, %v873
    %v875 = vrot.slane %v595, %v874
    %v876 = vsel %vm717, %v875, %v871
    %v877 = vlaneseq
    %v878 = vshrl.u32 %v877, 7
    %v879 = vsub.s32 %v719, %v878
    %v880 = vrot.slane %v598, %v879
    %v881 = vsel %vm724, %v880, %v876
    %v882 = vlaneseq
    %v883 = vshrl.u32 %v882, 7
    %v884 = vsub.s32 %v672, %v883
    %v885 = vrot.slane %v601, %v884
    %v886 = vlaneseq
    %v887 = vshrl.u32 %v886, 7
    %v888 = vsub.s32 %v677, %v887
    %v889 = vrot.slane %v604, %v888
    %v890 = vsel %vm682, %v889, %v885
    %v891 = vlaneseq
    %v892 = vshrl.u32 %v891, 7
    %v893 = vsub.s32 %v684, %v892
    %v894 = vrot.slane %v607, %v893
    %v895 = vsel %vm689, %v894, %v890
    %v896 = vlaneseq
    %v897 = vshrl.u32 %v896, 7
    %v898 = vsub.s32 %v691, %v897
    %v899 = vrot.slane %v610, %v898
    %v900 = vsel %vm696, %v899, %v895
    %v901 = vlaneseq
    %v902 = vshrl.u32 %v901, 7
    %v903 = vsub.s32 %v698, %v902
    %v904 = vrot.slane %v613, %v903
    %v905 = vsel %vm703, %v904, %v900
    %v906 = vlaneseq
    %v907 = vshrl.u32 %v906, 7
    %v908 = vsub.s32 %v705, %v907
    %v909 = vrot.slane %v616, %v908
    %v910 = vsel %vm710, %v909, %v905
    %v911 = vlaneseq
    %v912 = vshrl.u32 %v911, 7
    %v913 = vsub.s32 %v712, %v912
    %v914 = vrot.slane %v619, %v913
    %v915 = vsel %vm717, %v914, %v910
    %v916 = vlaneseq
    %v917 = vshrl.u32 %v916, 7
    %v918 = vsub.s32 %v719, %v917
    %v919 = vrot.slane %v622, %v918
    %v920 = vsel %vm724, %v919, %v915
    %v921 = vlaneseq
    %v922 = vshrl.u32 %v921, 7
    %v923 = vsub.s32 %v672, %v922
    %v924 = vrot.slane %v625, %v923
    %v925 = vlaneseq
    %v926 = vshrl.u32 %v925, 7
    %v927 = vsub.s32 %v677, %v926
    %v928 = vrot.slane %v628, %v927
    %v929 = vsel %vm682, %v928, %v924
    %v930 = vlaneseq
    %v931 = vshrl.u32 %v930, 7
    %v932 = vsub.s32 %v684, %v931
    %v933 = vrot.slane %v631, %v932
    %v934 = vsel %vm689, %v933, %v929
    %v935 = vlaneseq
    %v936 = vshrl.u32 %v935, 7
    %v937 = vsub.s32 %v691, %v936
    %v938 = vrot.slane %v634, %v937
    %v939 = vsel %vm696, %v938, %v934
    %v940 = vlaneseq
    %v941 = vshrl.u32 %v940, 7
    %v942 = vsub.s32 %v698, %v941
    %v943 = vrot.slane %v637, %v942
    %v944 = vsel %vm703, %v943, %v939
    %v945 = vlaneseq
    %v946 = vshrl.u32 %v945, 7
    %v947 = vsub.s32 %v705, %v946
    %v948 = vrot.slane %v640, %v947
    %v949 = vsel %vm710, %v948, %v944
    %v950 = vlaneseq
    %v951 = vshrl.u32 %v950, 7
    %v952 = vsub.s32 %v712, %v951
    %v953 = vrot.slane %v643, %v952
    %v954 = vsel %vm717, %v953, %v949
    %v955 = vlaneseq
    %v956 = vshrl.u32 %v955, 7
    %v957 = vsub.s32 %v719, %v956
    %v958 = vrot.slane %v646, %v957
    %v959 = vsel %vm724, %v958, %v954
    %v960 = vlaneseq
    %v961 = vshrl.u32 %v960, 7
    %v962 = vsub.s32 %v672, %v961
    %v963 = vrot.slane %v649, %v962
    %v964 = vlaneseq
    %v965 = vshrl.u32 %v964, 7
    %v966 = vsub.s32 %v677, %v965
    %v967 = vrot.slane %v652, %v966
    %v968 = vsel %vm682, %v967, %v963
    %v969 = vlaneseq
    %v970 = vshrl.u32 %v969, 7
    %v971 = vsub.s32 %v684, %v970
    %v972 = vrot.slane %v655, %v971
    %v973 = vsel %vm689, %v972, %v968
    %v974 = vlaneseq
    %v975 = vshrl.u32 %v974, 7
    %v976 = vsub.s32 %v691, %v975
    %v977 = vrot.slane %v658, %v976
    %v978 = vsel %vm696, %v977, %v973
    %v979 = vlaneseq
    %v980 = vshrl.u32 %v979, 7
    %v981 = vsub.s32 %v698, %v980
    %v982 = vrot.slane %v661, %v981
    %v983 = vsel %vm703, %v982, %v978
    %v984 = vlaneseq
    %v985 = vshrl.u32 %v984, 7
    %v986 = vsub.s32 %v705, %v985
    %v987 = vrot.slane %v664, %v986
    %v988 = vsel %vm710, %v987, %v983
    %v989 = vlaneseq
    %v990 = vshrl.u32 %v989, 7
    %v991 = vsub.s32 %v712, %v990
    %v992 = vrot.slane %v667, %v991
    %v993 = vsel %vm717, %v992, %v988
    %v994 = vlaneseq
    %v995 = vshrl.u32 %v994, 7
    %v996 = vsub.s32 %v719, %v995
    %v997 = vrot.slane %v670, %v996
    %v998 = vsel %vm724, %v997, %v993
    %vm999 = vcmask 1041409
    %v1000 = vsel %vm999, %v764, %v725
    %vm1001 = vcmask 1042434
    %v1002 = vsel %vm1001, %v803, %v1000
    %vm1003 = vcmask 1043459
    %v1004 = vsel %vm1003, %v842, %v1002
    %v1005 = vsel %vm999, %v920, %v881
    %v1006 = vsel %vm1001, %v959, %v1005
    %v1007 = vsel %vm1003, %v998, %v1006
    %vm1010 = vcmask 519168
    %v1011 = vsel %vm1010, %v1004, 0.0
    %1012 = vadd.xlane.f32.xlu0 %v1011
    %v1013 = vpop.xlane.xlu0 %1012
    %v1014 = vsel %vm1010, %v1007, 0.0
    %1015 = vadd.xlane.f32.xlu0 %v1014
    %v1016 = vpop.xlane.xlu0 %1015
    %v1017 = vld [vmem:[#allocation7] sm:$0x1]
    %v1019 = vlaneseq
    %v1020 = vshrl.u32 %v1019, 7
    %v1021 = vsub.s32 0, %v1020
    %v1022 = vrot.slane %v1017, %v1021
    %1024 = vbcast.lane.b32.xlu0 %v1022, 256
    %v1025 = vpop.permute.xlu0 %1024
    %v1027 = vadd.f32 %v1013, %v1025
    %v1028 = vadd.f32 %v1016, %v1025
    %v1029 = vmax.f32 %v1027, 0.0
    %v1030 = vmax.f32 %v1028, 0.0
    %v1031 = vld [vmem:[#allocation8] sm:$0xf]
    %v1032 = vlaneseq
    %v1033 = vshrl.u32 %v1032, 7
    %v1034 = vsub.s32 0, %v1033
    %v1035 = vrot.slane %v1029, %v1034
    %v1036 = vlaneseq
    %v1037 = vshrl.u32 %v1036, 7
    %v1038 = vsub.s32 0, %v1037
    %v1039 = vrot.slane %v1030, %v1038
    %v1040 = vlaneseq
    %v1041 = vshrl.u32 %v1040, 7
    %v1042 = vsub.s32 0, %v1041
    %v1043 = vrot.slane %v1031, %v1042
    %1046 = vbcast.lane.b32.xlu0 %v1043, 256
    %v1047 = vpop.permute.xlu0 %1046
    %s1049 = sor.u32 256, 8
    %1050 = vbcast.lane.b32.xlu0 %v1043, %s1049
    %v1051 = vpop.permute.xlu0 %1050
    %s1053 = sor.u32 256, 16
    %1054 = vbcast.lane.b32.xlu0 %v1043, %s1053
    %v1055 = vpop.permute.xlu0 %1054
    %s1057 = sor.u32 256, 24
    %1058 = vbcast.lane.b32.xlu0 %v1043, %s1057
    %v1059 = vpop.permute.xlu0 %1058
    %s1061 = sor.u32 256, 32
    %1062 = vbcast.lane.b32.xlu0 %v1043, %s1061
    %v1063 = vpop.permute.xlu0 %1062
    %s1065 = sor.u32 256, 40
    %1066 = vbcast.lane.b32.xlu0 %v1043, %s1065
    %v1067 = vpop.permute.xlu0 %1066
    %s1069 = sor.u32 256, 48
    %1070 = vbcast.lane.b32.xlu0 %v1043, %s1069
    %v1071 = vpop.permute.xlu0 %1070
    %s1073 = sor.u32 256, 56
    %1074 = vbcast.lane.b32.xlu0 %v1043, %s1073
    %v1075 = vpop.permute.xlu0 %1074
    %v1084 = vmul.f32 %v1035, %v1047
    %v1085 = vmul.f32 %v1035, %v1051
    %v1086 = vmul.f32 %v1035, %v1055
    %v1087 = vmul.f32 %v1035, %v1059
    %v1088 = vmul.f32 %v1035, %v1063
    %v1089 = vmul.f32 %v1035, %v1067
    %v1090 = vmul.f32 %v1035, %v1071
    %v1091 = vmul.f32 %v1035, %v1075
    %v1092 = vmul.f32 %v1039, %v1047
    %v1093 = vmul.f32 %v1039, %v1051
    %v1094 = vmul.f32 %v1039, %v1055
    %v1095 = vmul.f32 %v1039, %v1059
    %v1096 = vmul.f32 %v1039, %v1063
    %v1097 = vmul.f32 %v1039, %v1067
    %v1098 = vmul.f32 %v1039, %v1071
    %v1099 = vmul.f32 %v1039, %v1075
    %v1100 = vadd.f32 %v1084, 0.0
    %v1101 = vadd.f32 %v1085, 0.0
    %v1102 = vadd.f32 %v1086, 0.0
    %v1103 = vadd.f32 %v1087, 0.0
    %v1104 = vadd.f32 %v1088, 0.0
    %v1105 = vadd.f32 %v1089, 0.0
    %v1106 = vadd.f32 %v1090, 0.0
    %v1107 = vadd.f32 %v1091, 0.0
    %v1108 = vadd.f32 %v1092, 0.0
    %v1109 = vadd.f32 %v1093, 0.0
    %v1110 = vadd.f32 %v1094, 0.0
    %v1111 = vadd.f32 %v1095, 0.0
    %v1112 = vadd.f32 %v1096, 0.0
    %v1113 = vadd.f32 %v1097, 0.0
    %v1114 = vadd.f32 %v1098, 0.0
    %v1115 = vadd.f32 %v1099, 0.0
    %v1116 = vlaneseq
    %v1117 = vshrl.u32 %v1116, 7
    %v1118 = vsub.s32 1, %v1117
    %v1119 = vrot.slane %v1029, %v1118
    %v1120 = vlaneseq
    %v1121 = vshrl.u32 %v1120, 7
    %v1122 = vsub.s32 1, %v1121
    %v1123 = vrot.slane %v1030, %v1122
    %v1124 = vlaneseq
    %v1125 = vshrl.u32 %v1124, 7
    %v1126 = vsub.s32 1, %v1125
    %v1127 = vrot.slane %v1031, %v1126
    %1130 = vbcast.lane.b32.xlu0 %v1127, 256
    %v1131 = vpop.permute.xlu0 %1130
    %s1133 = sor.u32 256, 8
    %1134 = vbcast.lane.b32.xlu0 %v1127, %s1133
    %v1135 = vpop.permute.xlu0 %1134
    %s1137 = sor.u32 256, 16
    %1138 = vbcast.lane.b32.xlu0 %v1127, %s1137
    %v1139 = vpop.permute.xlu0 %1138
    %s1141 = sor.u32 256, 24
    %1142 = vbcast.lane.b32.xlu0 %v1127, %s1141
    %v1143 = vpop.permute.xlu0 %1142
    %s1145 = sor.u32 256, 32
    %1146 = vbcast.lane.b32.xlu0 %v1127, %s1145
    %v1147 = vpop.permute.xlu0 %1146
    %s1149 = sor.u32 256, 40
    %1150 = vbcast.lane.b32.xlu0 %v1127, %s1149
    %v1151 = vpop.permute.xlu0 %1150
    %s1153 = sor.u32 256, 48
    %1154 = vbcast.lane.b32.xlu0 %v1127, %s1153
    %v1155 = vpop.permute.xlu0 %1154
    %s1157 = sor.u32 256, 56
    %1158 = vbcast.lane.b32.xlu0 %v1127, %s1157
    %v1159 = vpop.permute.xlu0 %1158
    %v1168 = vmul.f32 %v1119, %v1131
    %v1169 = vmul.f32 %v1119, %v1135
    %v1170 = vmul.f32 %v1119, %v1139
    %v1171 = vmul.f32 %v1119, %v1143
    %v1172 = vmul.f32 %v1119, %v1147
    %v1173 = vmul.f32 %v1119, %v1151
    %v1174 = vmul.f32 %v1119, %v1155
    %v1175 = vmul.f32 %v1119, %v1159
    %v1176 = vmul.f32 %v1123, %v1131
    %v1177 = vmul.f32 %v1123, %v1135
    %v1178 = vmul.f32 %v1123, %v1139
    %v1179 = vmul.f32 %v1123, %v1143
    %v1180 = vmul.f32 %v1123, %v1147
    %v1181 = vmul.f32 %v1123, %v1151
    %v1182 = vmul.f32 %v1123, %v1155
    %v1183 = vmul.f32 %v1123, %v1159
    %v1184 = vadd.f32 %v1100, %v1168
    %v1185 = vadd.f32 %v1101, %v1169
    %v1186 = vadd.f32 %v1102, %v1170
    %v1187 = vadd.f32 %v1103, %v1171
    %v1188 = vadd.f32 %v1104, %v1172
    %v1189 = vadd.f32 %v1105, %v1173
    %v1190 = vadd.f32 %v1106, %v1174
    %v1191 = vadd.f32 %v1107, %v1175
    %v1192 = vadd.f32 %v1108, %v1176
    %v1193 = vadd.f32 %v1109, %v1177
    %v1194 = vadd.f32 %v1110, %v1178
    %v1195 = vadd.f32 %v1111, %v1179
    %v1196 = vadd.f32 %v1112, %v1180
    %v1197 = vadd.f32 %v1113, %v1181
    %v1198 = vadd.f32 %v1114, %v1182
    %v1199 = vadd.f32 %v1115, %v1183
    %v1200 = vlaneseq
    %v1201 = vshrl.u32 %v1200, 7
    %v1202 = vsub.s32 2, %v1201
    %v1203 = vrot.slane %v1029, %v1202
    %v1204 = vlaneseq
    %v1205 = vshrl.u32 %v1204, 7
    %v1206 = vsub.s32 2, %v1205
    %v1207 = vrot.slane %v1030, %v1206
    %v1208 = vlaneseq
    %v1209 = vshrl.u32 %v1208, 7
    %v1210 = vsub.s32 2, %v1209
    %v1211 = vrot.slane %v1031, %v1210
    %1214 = vbcast.lane.b32.xlu0 %v1211, 256
    %v1215 = vpop.permute.xlu0 %1214
    %s1217 = sor.u32 256, 8
    %1218 = vbcast.lane.b32.xlu0 %v1211, %s1217
    %v1219 = vpop.permute.xlu0 %1218
    %s1221 = sor.u32 256, 16
    %1222 = vbcast.lane.b32.xlu0 %v1211, %s1221
    %v1223 = vpop.permute.xlu0 %1222
    %s1225 = sor.u32 256, 24
    %1226 = vbcast.lane.b32.xlu0 %v1211, %s1225
    %v1227 = vpop.permute.xlu0 %1226
    %s1229 = sor.u32 256, 32
    %1230 = vbcast.lane.b32.xlu0 %v1211, %s1229
    %v1231 = vpop.permute.xlu0 %1230
    %s1233 = sor.u32 256, 40
    %1234 = vbcast.lane.b32.xlu0 %v1211, %s1233
    %v1235 = vpop.permute.xlu0 %1234
    %s1237 = sor.u32 256, 48
    %1238 = vbcast.lane.b32.xlu0 %v1211, %s1237
    %v1239 = vpop.permute.xlu0 %1238
    %s1241 = sor.u32 256, 56
    %1242 = vbcast.lane.b32.xlu0 %v1211, %s1241
    %v1243 = vpop.permute.xlu0 %1242
    %v1252 = vmul.f32 %v1203, %v1215
    %v1253 = vmul.f32 %v1203, %v1219
    %v1254 = vmul.f32 %v1203, %v1223
    %v1255 = vmul.f32 %v1203, %v1227
    %v1256 = vmul.f32 %v1203, %v1231
    %v1257 = vmul.f32 %v1203, %v1235
    %v1258 = vmul.f32 %v1203, %v1239
    %v1259 = vmul.f32 %v1203, %v1243
    %v1260 = vmul.f32 %v1207, %v1215
    %v1261 = vmul.f32 %v1207, %v1219
    %v1262 = vmul.f32 %v1207, %v1223
    %v1263 = vmul.f32 %v1207, %v1227
    %v1264 = vmul.f32 %v1207, %v1231
    %v1265 = vmul.f32 %v1207, %v1235
    %v1266 = vmul.f32 %v1207, %v1239
    %v1267 = vmul.f32 %v1207, %v1243
    %v1268 = vadd.f32 %v1184, %v1252
    %v1269 = vadd.f32 %v1185, %v1253
    %v1270 = vadd.f32 %v1186, %v1254
    %v1271 = vadd.f32 %v1187, %v1255
    %v1272 = vadd.f32 %v1188, %v1256
    %v1273 = vadd.f32 %v1189, %v1257
    %v1274 = vadd.f32 %v1190, %v1258
    %v1275 = vadd.f32 %v1191, %v1259
    %v1276 = vadd.f32 %v1192, %v1260
    %v1277 = vadd.f32 %v1193, %v1261
    %v1278 = vadd.f32 %v1194, %v1262
    %v1279 = vadd.f32 %v1195, %v1263
    %v1280 = vadd.f32 %v1196, %v1264
    %v1281 = vadd.f32 %v1197, %v1265
    %v1282 = vadd.f32 %v1198, %v1266
    %v1283 = vadd.f32 %v1199, %v1267
    %v1284 = vlaneseq
    %v1285 = vshrl.u32 %v1284, 7
    %v1286 = vsub.s32 3, %v1285
    %v1287 = vrot.slane %v1029, %v1286
    %v1288 = vlaneseq
    %v1289 = vshrl.u32 %v1288, 7
    %v1290 = vsub.s32 3, %v1289
    %v1291 = vrot.slane %v1030, %v1290
    %v1292 = vlaneseq
    %v1293 = vshrl.u32 %v1292, 7
    %v1294 = vsub.s32 3, %v1293
    %v1295 = vrot.slane %v1031, %v1294
    %1298 = vbcast.lane.b32.xlu0 %v1295, 256
    %v1299 = vpop.permute.xlu0 %1298
    %s1301 = sor.u32 256, 8
    %1302 = vbcast.lane.b32.xlu0 %v1295, %s1301
    %v1303 = vpop.permute.xlu0 %1302
    %s1305 = sor.u32 256, 16
    %1306 = vbcast.lane.b32.xlu0 %v1295, %s1305
    %v1307 = vpop.permute.xlu0 %1306
    %s1309 = sor.u32 256, 24
    %1310 = vbcast.lane.b32.xlu0 %v1295, %s1309
    %v1311 = vpop.permute.xlu0 %1310
    %s1313 = sor.u32 256, 32
    %1314 = vbcast.lane.b32.xlu0 %v1295, %s1313
    %v1315 = vpop.permute.xlu0 %1314
    %s1317 = sor.u32 256, 40
    %1318 = vbcast.lane.b32.xlu0 %v1295, %s1317
    %v1319 = vpop.permute.xlu0 %1318
    %s1321 = sor.u32 256, 48
    %1322 = vbcast.lane.b32.xlu0 %v1295, %s1321
    %v1323 = vpop.permute.xlu0 %1322
    %s1325 = sor.u32 256, 56
    %1326 = vbcast.lane.b32.xlu0 %v1295, %s1325
    %v1327 = vpop.permute.xlu0 %1326
    %v1336 = vmul.f32 %v1287, %v1299
    %v1337 = vmul.f32 %v1287, %v1303
    %v1338 = vmul.f32 %v1287, %v1307
    %v1339 = vmul.f32 %v1287, %v1311
    %v1340 = vmul.f32 %v1287, %v1315
    %v1341 = vmul.f32 %v1287, %v1319
    %v1342 = vmul.f32 %v1287, %v1323
    %v1343 = vmul.f32 %v1287, %v1327
    %v1344 = vmul.f32 %v1291, %v1299
    %v1345 = vmul.f32 %v1291, %v1303
    %v1346 = vmul.f32 %v1291, %v1307
    %v1347 = vmul.f32 %v1291, %v1311
    %v1348 = vmul.f32 %v1291, %v1315
    %v1349 = vmul.f32 %v1291, %v1319
    %v1350 = vmul.f32 %v1291, %v1323
    %v1351 = vmul.f32 %v1291, %v1327
    %v1352 = vadd.f32 %v1268, %v1336
    %v1353 = vadd.f32 %v1269, %v1337
    %v1354 = vadd.f32 %v1270, %v1338
    %v1355 = vadd.f32 %v1271, %v1339
    %v1356 = vadd.f32 %v1272, %v1340
    %v1357 = vadd.f32 %v1273, %v1341
    %v1358 = vadd.f32 %v1274, %v1342
    %v1359 = vadd.f32 %v1275, %v1343
    %v1360 = vadd.f32 %v1276, %v1344
    %v1361 = vadd.f32 %v1277, %v1345
    %v1362 = vadd.f32 %v1278, %v1346
    %v1363 = vadd.f32 %v1279, %v1347
    %v1364 = vadd.f32 %v1280, %v1348
    %v1365 = vadd.f32 %v1281, %v1349
    %v1366 = vadd.f32 %v1282, %v1350
    %v1367 = vadd.f32 %v1283, %v1351
    %v1368 = vld [vmem:[#allocation10] sm:$0x1]
    %v1370 = vlaneseq
    %v1371 = vshrl.u32 %v1370, 7
    %v1372 = vsub.s32 0, %v1371
    %v1373 = vrot.slane %v1368, %v1372
    %1375 = vbcast.lane.b32.xlu0 %v1373, 256
    %v1376 = vpop.permute.xlu0 %1375
    %s1378 = sor.u32 256, 8
    %1379 = vbcast.lane.b32.xlu0 %v1373, %s1378
    %v1380 = vpop.permute.xlu0 %1379
    %s1382 = sor.u32 256, 16
    %1383 = vbcast.lane.b32.xlu0 %v1373, %s1382
    %v1384 = vpop.permute.xlu0 %1383
    %s1386 = sor.u32 256, 24
    %1387 = vbcast.lane.b32.xlu0 %v1373, %s1386
    %v1388 = vpop.permute.xlu0 %1387
    %s1390 = sor.u32 256, 32
    %1391 = vbcast.lane.b32.xlu0 %v1373, %s1390
    %v1392 = vpop.permute.xlu0 %1391
    %s1394 = sor.u32 256, 40
    %1395 = vbcast.lane.b32.xlu0 %v1373, %s1394
    %v1396 = vpop.permute.xlu0 %1395
    %s1398 = sor.u32 256, 48
    %1399 = vbcast.lane.b32.xlu0 %v1373, %s1398
    %v1400 = vpop.permute.xlu0 %1399
    %s1402 = sor.u32 256, 56
    %1403 = vbcast.lane.b32.xlu0 %v1373, %s1402
    %v1404 = vpop.permute.xlu0 %1403
    %v1413 = vadd.f32 %v1352, %v1376
    %v1414 = vadd.f32 %v1353, %v1380
    %v1415 = vadd.f32 %v1354, %v1384
    %v1416 = vadd.f32 %v1355, %v1388
    %v1417 = vadd.f32 %v1356, %v1392
    %v1418 = vadd.f32 %v1357, %v1396
    %v1419 = vadd.f32 %v1358, %v1400
    %v1420 = vadd.f32 %v1359, %v1404
    %v1421 = vadd.f32 %v1360, %v1376
    %v1422 = vadd.f32 %v1361, %v1380
    %v1423 = vadd.f32 %v1362, %v1384
    %v1424 = vadd.f32 %v1363, %v1388
    %v1425 = vadd.f32 %v1364, %v1392
    %v1426 = vadd.f32 %v1365, %v1396
    %v1427 = vadd.f32 %v1366, %v1400
    %v1428 = vadd.f32 %v1367, %v1404
    %v1429 = vxor.u32 %v1413, 2147483648
    %v1430 = vxor.u32 %v1414, 2147483648
    %v1431 = vxor.u32 %v1415, 2147483648
    %v1432 = vxor.u32 %v1416, 2147483648
    %v1433 = vxor.u32 %v1417, 2147483648
    %v1434 = vxor.u32 %v1418, 2147483648
    %v1435 = vxor.u32 %v1419, 2147483648
    %v1436 = vxor.u32 %v1420, 2147483648
    %v1437 = vxor.u32 %v1421, 2147483648
    %v1438 = vxor.u32 %v1422, 2147483648
    %v1439 = vxor.u32 %v1423, 2147483648
    %v1440 = vxor.u32 %v1424, 2147483648
    %v1441 = vxor.u32 %v1425, 2147483648
    %v1442 = vxor.u32 %v1426, 2147483648
    %v1443 = vxor.u32 %v1427, 2147483648
    %v1444 = vxor.u32 %v1428, 2147483648
    %v1445 = vmul.f32 %v1429, 1.442695
    %v1446 = vpow.pop %v1445
    %v1447 = vmul.f32 %v1430, 1.442695
    %v1448 = vpow.pop %v1447
    %v1449 = vmul.f32 %v1431, 1.442695
    %v1450 = vpow.pop %v1449
    %v1451 = vmul.f32 %v1432, 1.442695
    %v1452 = vpow.pop %v1451
    %v1453 = vmul.f32 %v1433, 1.442695
    %v1454 = vpow.pop %v1453
    %v1455 = vmul.f32 %v1434, 1.442695
    %v1456 = vpow.pop %v1455
    %v1457 = vmul.f32 %v1435, 1.442695
    %v1458 = vpow.pop %v1457
    %v1459 = vmul.f32 %v1436, 1.442695
    %v1460 = vpow.pop %v1459
    %v1461 = vmul.f32 %v1437, 1.442695
    %v1462 = vpow.pop %v1461
    %v1463 = vmul.f32 %v1438, 1.442695
    %v1464 = vpow.pop %v1463
    %v1465 = vmul.f32 %v1439, 1.442695
    %v1466 = vpow.pop %v1465
    %v1467 = vmul.f32 %v1440, 1.442695
    %v1468 = vpow.pop %v1467
    %v1469 = vmul.f32 %v1441, 1.442695
    %v1470 = vpow.pop %v1469
    %v1471 = vmul.f32 %v1442, 1.442695
    %v1472 = vpow.pop %v1471
    %v1473 = vmul.f32 %v1443, 1.442695
    %v1474 = vpow.pop %v1473
    %v1475 = vmul.f32 %v1444, 1.442695
    %v1476 = vpow.pop %v1475
    %v1477 = vadd.f32 %v1446, 1.0
    %v1478 = vadd.f32 %v1448, 1.0
    %v1479 = vadd.f32 %v1450, 1.0
    %v1480 = vadd.f32 %v1452, 1.0
    %v1481 = vadd.f32 %v1454, 1.0
    %v1482 = vadd.f32 %v1456, 1.0
    %v1483 = vadd.f32 %v1458, 1.0
    %v1484 = vadd.f32 %v1460, 1.0
    %v1485 = vadd.f32 %v1462, 1.0
    %v1486 = vadd.f32 %v1464, 1.0
    %v1487 = vadd.f32 %v1466, 1.0
    %v1488 = vadd.f32 %v1468, 1.0
    %v1489 = vadd.f32 %v1470, 1.0
    %v1490 = vadd.f32 %v1472, 1.0
    %v1491 = vadd.f32 %v1474, 1.0
    %v1492 = vadd.f32 %v1476, 1.0
    %v1493 = vrcp.pop %v1477
    %v1494 = vmul.f32 1.0, %v1493
    %v1495 = vrcp.pop %v1478
    %v1496 = vmul.f32 1.0, %v1495
    %v1497 = vrcp.pop %v1479
    %v1498 = vmul.f32 1.0, %v1497
    %v1499 = vrcp.pop %v1480
    %v1500 = vmul.f32 1.0, %v1499
    %v1501 = vrcp.pop %v1481
    %v1502 = vmul.f32 1.0, %v1501
    %v1503 = vrcp.pop %v1482
    %v1504 = vmul.f32 1.0, %v1503
    %v1505 = vrcp.pop %v1483
    %v1506 = vmul.f32 1.0, %v1505
    %v1507 = vrcp.pop %v1484
    %v1508 = vmul.f32 1.0, %v1507
    %v1509 = vrcp.pop %v1485
    %v1510 = vmul.f32 1.0, %v1509
    %v1511 = vrcp.pop %v1486
    %v1512 = vmul.f32 1.0, %v1511
    %v1513 = vrcp.pop %v1487
    %v1514 = vmul.f32 1.0, %v1513
    %v1515 = vrcp.pop %v1488
    %v1516 = vmul.f32 1.0, %v1515
    %v1517 = vrcp.pop %v1489
    %v1518 = vmul.f32 1.0, %v1517
    %v1519 = vrcp.pop %v1490
    %v1520 = vmul.f32 1.0, %v1519
    %v1521 = vrcp.pop %v1491
    %v1522 = vmul.f32 1.0, %v1521
    %v1523 = vrcp.pop %v1492
    %v1524 = vmul.f32 1.0, %v1523
    %1526 = vset.pattern.permute.xlu0 0
    %1527 = vperm.xlu0 %1526, %v1494
    %v1528 = vpop.permute.xlu0 %1527
    %1531 = vset.pattern.permute.xlu0 0
    %1532 = vperm.xlu0 %1531, %v1496
    %v1533 = vpop.permute.xlu0 %1532
    %1536 = vset.pattern.permute.xlu0 0
    %1537 = vperm.xlu0 %1536, %v1498
    %v1538 = vpop.permute.xlu0 %1537
    %1541 = vset.pattern.permute.xlu0 0
    %1542 = vperm.xlu0 %1541, %v1500
    %v1543 = vpop.permute.xlu0 %1542
    %1546 = vset.pattern.permute.xlu0 0
    %1547 = vperm.xlu0 %1546, %v1502
    %v1548 = vpop.permute.xlu0 %1547
    %1551 = vset.pattern.permute.xlu0 0
    %1552 = vperm.xlu0 %1551, %v1504
    %v1553 = vpop.permute.xlu0 %1552
    %1556 = vset.pattern.permute.xlu0 0
    %1557 = vperm.xlu0 %1556, %v1506
    %v1558 = vpop.permute.xlu0 %1557
    %1561 = vset.pattern.permute.xlu0 0
    %1562 = vperm.xlu0 %1561, %v1508
    %v1563 = vpop.permute.xlu0 %1562
    %1566 = vset.pattern.permute.xlu0 0
    %1567 = vperm.xlu0 %1566, %v1510
    %v1568 = vpop.permute.xlu0 %1567
    %1571 = vset.pattern.permute.xlu0 0
    %1572 = vperm.xlu0 %1571, %v1512
    %v1573 = vpop.permute.xlu0 %1572
    %1576 = vset.pattern.permute.xlu0 0
    %1577 = vperm.xlu0 %1576, %v1514
    %v1578 = vpop.permute.xlu0 %1577
    %1581 = vset.pattern.permute.xlu0 0
    %1582 = vperm.xlu0 %1581, %v1516
    %v1583 = vpop.permute.xlu0 %1582
    %1586 = vset.pattern.permute.xlu0 0
    %1587 = vperm.xlu0 %1586, %v1518
    %v1588 = vpop.permute.xlu0 %1587
    %1591 = vset.pattern.permute.xlu0 0
    %1592 = vperm.xlu0 %1591, %v1520
    %v1593 = vpop.permute.xlu0 %1592
    %1596 = vset.pattern.permute.xlu0 0
    %1597 = vperm.xlu0 %1596, %v1522
    %v1598 = vpop.permute.xlu0 %1597
    %1601 = vset.pattern.permute.xlu0 0
    %1602 = vperm.xlu0 %1601, %v1524
    %v1603 = vpop.permute.xlu0 %1602
    %v1605 = vmul.f32 %v81, %v1528
    %v1606 = vmul.f32 %v82, %v1528
    %v1607 = vmul.f32 %v83, %v1533
    %v1608 = vmul.f32 %v84, %v1533
    %v1609 = vmul.f32 %v85, %v1538
    %v1610 = vmul.f32 %v86, %v1538
    %v1611 = vmul.f32 %v87, %v1543
    %v1612 = vmul.f32 %v88, %v1543
    %v1613 = vmul.f32 %v89, %v1548
    %v1614 = vmul.f32 %v90, %v1548
    %v1615 = vmul.f32 %v91, %v1553
    %v1616 = vmul.f32 %v92, %v1553
    %v1617 = vmul.f32 %v93, %v1558
    %v1618 = vmul.f32 %v94, %v1558
    %v1619 = vmul.f32 %v95, %v1563
    %v1620 = vmul.f32 %v96, %v1563
    %v1621 = vmul.f32 %v97, %v1568
    %v1622 = vmul.f32 %v98, %v1568
    %v1623 = vmul.f32 %v99, %v1573
    %v1624 = vmul.f32 %v100, %v1573
    %v1625 = vmul.f32 %v101, %v1578
    %v1626 = vmul.f32 %v102, %v1578
    %v1627 = vmul.f32 %v103, %v1583
    %v1628 = vmul.f32 %v104, %v1583
    %v1629 = vmul.f32 %v105, %v1588
    %v1630 = vmul.f32 %v106, %v1588
    %v1631 = vmul.f32 %v107, %v1593
    %v1632 = vmul.f32 %v108, %v1593
    %v1633 = vmul.f32 %v109, %v1598
    %v1634 = vmul.f32 %v110, %v1598
    %v1635 = vmul.f32 %v111, %v1603
    %v1636 = vmul.f32 %v112, %v1603
    %1637 = vst [vmem:[#allocation11] sm:$0xff] %v1605
    %1638 = vst [vmem:[#allocation11 + $0x8] sm:$0xff] %v1606
    %1639 = vst [vmem:[#allocation11 + $0x10] sm:$0xff] %v1607
    %1640 = vst [vmem:[#allocation11 + $0x18] sm:$0xff] %v1608
    %1641 = vst [vmem:[#allocation11 + $0x20] sm:$0xff] %v1609
    %1642 = vst [vmem:[#allocation11 + $0x28] sm:$0xff] %v1610
    %1643 = vst [vmem:[#allocation11 + $0x30] sm:$0xff] %v1611
    %1644 = vst [vmem:[#allocation11 + $0x38] sm:$0xff] %v1612
    %1645 = vst [vmem:[#allocation11 + $0x40] sm:$0xff] %v1613
    %1646 = vst [vmem:[#allocation11 + $0x48] sm:$0xff] %v1614
    %1647 = vst [vmem:[#allocation11 + $0x50] sm:$0xff] %v1615
    %1648 = vst [vmem:[#allocation11 + $0x58] sm:$0xff] %v1616
    %1649 = vst [vmem:[#allocation11 + $0x60] sm:$0xff] %v1617
    %1650 = vst [vmem:[#allocation11 + $0x68] sm:$0xff] %v1618
    %1651 = vst [vmem:[#allocation11 + $0x70] sm:$0xff] %v1619
    %1652 = vst [vmem:[#allocation11 + $0x78] sm:$0xff] %v1620
    %1653 = vst [vmem:[#allocation11 + $0x80] sm:$0xff] %v1621
    %1654 = vst [vmem:[#allocation11 + $0x88] sm:$0xff] %v1622
    %1655 = vst [vmem:[#allocation11 + $0x90] sm:$0xff] %v1623
    %1656 = vst [vmem:[#allocation11 + $0x98] sm:$0xff] %v1624
    %1657 = vst [vmem:[#allocation11 + $0xa0] sm:$0xff] %v1625
    %1658 = vst [vmem:[#allocation11 + $0xa8] sm:$0xff] %v1626
    %1659 = vst [vmem:[#allocation11 + $0xb0] sm:$0xff] %v1627
    %1660 = vst [vmem:[#allocation11 + $0xb8] sm:$0xff] %v1628
    %1661 = vst [vmem:[#allocation11 + $0xc0] sm:$0xff] %v1629
    %1662 = vst [vmem:[#allocation11 + $0xc8] sm:$0xff] %v1630
    %1663 = vst [vmem:[#allocation11 + $0xd0] sm:$0xff] %v1631
    %1664 = vst [vmem:[#allocation11 + $0xd8] sm:$0xff] %v1632
    %1665 = vst [vmem:[#allocation11 + $0xe0] sm:$0xff] %v1633
    %1666 = vst [vmem:[#allocation11 + $0xe8] sm:$0xff] %v1634
    %1667 = vst [vmem:[#allocation11 + $0xf0] sm:$0xff] %v1635
    %1668 = vst [vmem:[#allocation11 + $0xf8] sm:$0xff] %v1636
    // Predicated region
    $region42: #{tpu_custom_call.1} parent=1 // pred_check
      _
    $region43: #{tpu_custom_call.1} parent=1 // pred_check_branch
      %1670 = sbr.rel (0) target = $region45
    $region44: #{tpu_custom_call.1} parent=1 // pred_region
      %s1672 = ssub.s32 4096, 4096
      %1673 = vsyncadd [#allocation4], %s1672
      %s1674 = sshll.u32 [#allocation11], 4
      %s1675 = int_to_ptr.vmem [resolvable:$true] %s1674
      %1680 = dma.vmem_to_hbm [thread:$0]  %s1675, 4096, %s5, [#allocation4], 256, 256, 16
    $region45: #{tpu_custom_call.1} parent=1 // pred_fallthru
      _
    // Predicated region
    $region46: #{tpu_custom_call.1} parent=1 // pred_check
      _
    $region47: #{tpu_custom_call.1} parent=1 // pred_check_branch
      %1682 = sbr.rel (0) target = $region49
    $region48: #{tpu_custom_call.1} parent=1 // pred_region
      %1683 = dma.done [#allocation4], 4096
    $region49: #{tpu_custom_call.1} parent=1 // pred_fallthru
      _
    %1684 = vsyncpa [#allocation3], 1
    %1685 = vsyncpa [#allocation6], 1
    %1686 = vsyncpa [#allocation9], 1
    %1687 = vsyncpa [#allocation4], 1

</llo_original>
